<compile_context>
chip_gen: v7x
topology: tpu7x:2x2x1
jax: 0.10.0
libtpu: 0.0.40
codegen_flags: <defaults>
</compile_context>

<pallas_src>
import math
import jax
import jax.numpy as jnp
from jax import lax
from jax.experimental import pallas as pl
from jax.experimental.pallas import tpu as pltpu


def _round_up(a, b):
    return (a + b - 1) // b * b


def make_projector_t(options):
    """Build a callable proj (B,1,views,dets) -> image (B,1,height,width)."""
    views    = int(options[0])
    dets     = int(options[1])
    width    = int(options[2])
    height   = int(options[3])
    dImg     = float(options[4])
    dDet     = float(options[5])
    Ang0     = float(options[6])
    dAng     = float(options[7])
    # options[8]=s2r, options[9]=d2r unused in the parallel-beam approximation.
    binshift = float(options[10])

    det_center = (dets - 1) / 2.0 - binshift / dDet
    inv_dDet = 1.0 / dDet

    # ---- view blocking (reduction axis, innermost) -------------------------
    VB = 8 if views % 8 == 0 else views
    if (VB * dets) % 128 != 0 and VB != views:
        VB = views            # full-extent block is always a legal BlockSpec
    n_vblocks = views // VB

    # ---- pixel tiling (lane-dense, parallel axis) --------------------------
    HW = height * width
    TILE_P = min(512, _round_up(HW, 128))      # lane-dense; cap sized for v7x VMEM
    HW_pad = _round_up(HW, TILE_P)
    n_ptiles = HW_pad // TILE_P

    def bp_kernel(trig_ref, coords_ref, sino_ref, out_ref):
        # trig_ref  : VMEM (VB, 2)        [cos, sin] for this view block
        # coords_ref: VMEM (2, TILE_P)    [x; y] pixel centres of this pixel tile
        # sino_ref  : VMEM (B, VB*dets)   sinogram rows for this view block
        # out_ref   : VMEM (B, TILE_P)    image accumulator (resident over views)
        vb = pl.program_id(1)

        @pl.when(vb == 0)
        def _():
            out_ref[...] = jnp.zeros_like(out_ref)

        xs = coords_ref[0:1, :]                       # (1, TILE_P)
        ys = coords_ref[1:2, :]                       # (1, TILE_P)
        cos_v = trig_ref[:, 0:1]                      # (VB, 1)
        sin_v = trig_ref[:, 1:2]                      # (VB, 1)

        # detector coordinate (in detector-index units) hit by each pixel, per view
        t = (cos_v * xs + sin_v * ys) * inv_dDet + det_center        # (VB, TILE_P)

        # adjoint of linear detector interpolation == hat weights
        d_idx = lax.broadcasted_iota(jnp.int32, (1, dets, 1), 1).astype(jnp.float32)
        w = jnp.maximum(0.0, 1.0 - jnp.abs(t[:, None, :] - d_idx))   # (VB, dets, TILE_P)
        w = w.reshape(VB * dets, TILE_P)   # leading-dim merge: layout-preserving (dets%8==0)

        # single MXU matmul for the whole batch; f32 accumulate
        out_ref[...] += jnp.dot(sino_ref[...], w,
                                preferred_element_type=jnp.float32,
                                precision=lax.Precision.HIGHEST)

    def apply(proj):
        B = proj.shape[0]
        assert proj.shape == (B, 1, views, dets)
        sino = proj.reshape(B, views * dets).astype(jnp.float32)     # lane-dense K axis

        angles = Ang0 + dAng * jnp.arange(views, dtype=jnp.float32)
        trig = jnp.stack([jnp.cos(angles), jnp.sin(angles)], axis=1)  # (views, 2)

        # flattened (row-major) pixel-centre coordinates, zero-padded to HW_pad
        pix = jnp.arange(HW_pad, dtype=jnp.int32)
        col = (pix % width).astype(jnp.float32)
        row = (pix // width).astype(jnp.float32)
        x = (col - (width - 1) / 2.0) * dImg
        y = ((height - 1) / 2.0 - row) * dImg
        valid = pix < HW
        coords = jnp.stack([jnp.where(valid, x, 0.0),
                            jnp.where(valid, y, 0.0)], axis=0)        # (2, HW_pad)

        out = pl.pallas_call(
            bp_kernel,
            out_shape=jax.ShapeDtypeStruct((B, HW_pad), jnp.float32),
            grid=(n_ptiles, n_vblocks),                 # reduction (views) axis last
            in_specs=[
                pl.BlockSpec((VB, 2),        lambda p, vb: (vb, 0)),   # trig
                pl.BlockSpec((2, TILE_P),    lambda p, vb: (0, p)),    # pixel coords
                pl.BlockSpec((B, VB * dets), lambda p, vb: (0, vb)),   # sinogram block
            ],
            out_specs=pl.BlockSpec((B, TILE_P), lambda p, vb: (0, p)),
            compiler_params=pltpu.CompilerParams(
                dimension_semantics=("parallel", "arbitrary"),
                vmem_limit_bytes=48 * 1024 * 1024),
        )(trig, coords, sino)
        return out[:, :HW].reshape(B, 1, height, width)

    return apply


def reference_projection_t(proj, options):
    """Pure-JAX reference of the same parallel-beam adjoint (toy sizes only)."""
    views, dets = int(options[0]), int(options[1])
    width, height = int(options[2]), int(options[3])
    dImg, dDet = float(options[4]), float(options[5])
    Ang0, dAng = float(options[6]), float(options[7])
    binshift = float(options[10])
    B = proj.shape[0]
    sino = proj.reshape(B, views, dets).astype(jnp.float32)

    angles = Ang0 + dAng * jnp.arange(views, dtype=jnp.float32)
    xs = (jnp.arange(width, dtype=jnp.float32) - (width - 1) / 2.0) * dImg
    ys = ((height - 1) / 2.0 - jnp.arange(height, dtype=jnp.float32)) * dImg
    X, Y = jnp.meshgrid(xs, ys)                                  # (H, W)
    det_center = (dets - 1) / 2.0 - binshift / dDet

    t = (X[None] * jnp.cos(angles)[:, None, None]
         + Y[None] * jnp.sin(angles)[:, None, None]) / dDet + det_center   # (V, H, W)
    w = jnp.maximum(0.0, 1.0 - jnp.abs(t[..., None]
                                       - jnp.arange(dets, dtype=jnp.float32)))  # (V,H,W,D)
    img = jnp.einsum('vhwd,bvd->bhw', w, sino,
                     precision=lax.Precision.HIGHEST)
    return img.reshape(B, 1, height, width)


if __name__ == "__main__":
    # small, consistent geometry: 16 views, 32 detector bins, 16x16 image
    views, dets, width, height = 16, 32, 16, 16
    dImg, dDet = 1.0, 1.0
    Ang0, dAng = 0.0, 2.0 * math.pi / views
    s2r, d2r, binshift, scan_type = 500.0, 500.0, 0.0, 0.0
    options = jnp.array([views, dets, width, height, dImg, dDet, Ang0, dAng,
                         s2r, d2r, binshift, scan_type], dtype=jnp.float32)

    key = jax.random.PRNGKey(0)
    proj = jax.random.normal(key, (2, 1, views, dets), dtype=jnp.float32)

    projector_t = make_projector_t(options)
    img = jax.block_until_ready(projector_t(proj))

    ref = reference_projection_t(proj, options)
    assert img.shape == (2, 1, height, width)
    assert img.dtype == jnp.float32
    assert bool(jnp.all(jnp.isfinite(img)))
    assert bool(jnp.allclose(img, ref, rtol=1e-4, atol=1e-4))
    print("KERNEL_OK")
</pallas_src>

<mosaic_0001>
module attributes {stable_mosaic.version = 11 : i64} {
  func.func @bp_kernel(%arg0: i32, %arg1: i32, %arg2: memref<8x2xf32, #tpu.memory_space<vmem>>, %arg3: memref<2x256xf32, #tpu.memory_space<vmem>>, %arg4: memref<2x256xf32, #tpu.memory_space<vmem>>, %arg5: memref<2x256xf32, #tpu.memory_space<vmem>>) attributes {dimension_semantics = [#tpu.dimension_semantics<parallel>, #tpu.dimension_semantics<arbitrary>], iteration_bounds = array<i64: 1, 2>, scalar_prefetch = 0 : i64, scratch_operands = 0 : i64, tpu.core_type = #tpu.core_type<tc>, window_params = [{transform_indices = @transform_0, window_bounds = array<i64: 8, 2>}, {transform_indices = @transform_1, window_bounds = array<i64: 2, 256>}, {transform_indices = @transform_2, window_bounds = array<i64: 2, 256>}, {transform_indices = @transform_3, window_bounds = array<i64: 2, 256>}]} {
    %c0_i32 = arith.constant 0 : i32
    %0 = arith.cmpi eq, %arg1, %c0_i32 : i32
    %1 = arith.extui %0 : i1 to i32
    %c0_i32_0 = arith.constant 0 : i32
    %2 = arith.cmpi ne, %1, %c0_i32_0 : i32
    scf.if %2 {
      %cst_17 = arith.constant 0.000000e+00 : f32
      %35 = vector.broadcast %cst_17 : f32 to vector<2x256xf32>
      %c0_18 = arith.constant 0 : index
      %c0_19 = arith.constant 0 : index
      %36 = vector.load %arg5[%c0_18, %c0_19] : memref<2x256xf32, #tpu.memory_space<vmem>>, vector<2x256xf32>
      tpu.vector_store %arg5[%c0_18, %c0_19], %35 {strides = array<i32>} : memref<2x256xf32, #tpu.memory_space<vmem>>, vector<2x256xf32>,
    } else {
    }
    %c0 = arith.constant 0 : index
    %c0_1 = arith.constant 0 : index
    %3 = vector.load %arg3[%c0, %c0_1] : memref<2x256xf32, #tpu.memory_space<vmem>>, vector<1x256xf32>
    %c1 = arith.constant 1 : index
    %c0_2 = arith.constant 0 : index
    %4 = vector.load %arg3[%c1, %c0_2] : memref<2x256xf32, #tpu.memory_space<vmem>>, vector<1x256xf32>
    %c0_3 = arith.constant 0 : index
    %c0_4 = arith.constant 0 : index
    %5 = vector.load %arg2[%c0_3, %c0_4] : memref<8x2xf32, #tpu.memory_space<vmem>>, vector<8x1xf32>
    %c0_5 = arith.constant 0 : index
    %c1_6 = arith.constant 1 : index
    %6 = vector.load %arg2[%c0_5, %c1_6] : memref<8x2xf32, #tpu.memory_space<vmem>>, vector<8x1xf32>
    %7 = vector.broadcast %5 : vector<8x1xf32> to vector<8x256xf32>
    %8 = vector.broadcast %3 : vector<1x256xf32> to vector<8x256xf32>
    %9 = arith.mulf %7, %8 : vector<8x256xf32>
    %10 = vector.broadcast %6 : vector<8x1xf32> to vector<8x256xf32>
    %11 = vector.broadcast %4 : vector<1x256xf32> to vector<8x256xf32>
    %12 = arith.mulf %10, %11 : vector<8x256xf32>
    %13 = arith.addf %9, %12 : vector<8x256xf32>
    %cst = arith.constant 1.000000e+00 : f32
    %14 = vector.broadcast %cst : f32 to vector<8x256xf32>
    %15 = arith.mulf %13, %14 : vector<8x256xf32>
    %cst_7 = arith.constant 1.550000e+01 : f32
    %16 = vector.broadcast %cst_7 : f32 to vector<8x256xf32>
    %17 = arith.addf %15, %16 : vector<8x256xf32>
    %18 = tpu.iota {dimensions = array<i32: 1>} : vector<1x32x1xi32>
    %19 = arith.sitofp %18 : vector<1x32x1xi32> to vector<1x32x1xf32>
    %20 = vector.shape_cast %17 : vector<8x256xf32> to vector<8x1x256xf32>
    %21 = vector.broadcast %20 : vector<8x1x256xf32> to vector<8x32x256xf32>
    %22 = vector.broadcast %19 : vector<1x32x1xf32> to vector<8x32x256xf32>
    %23 = arith.subf %21, %22 : vector<8x32x256xf32>
    %24 = math.absf %23 : vector<8x32x256xf32>
    %cst_8 = arith.constant 1.000000e+00 : f32
    %25 = vector.broadcast %cst_8 : f32 to vector<8x32x256xf32>
    %26 = arith.subf %25, %24 : vector<8x32x256xf32>
    %cst_9 = arith.constant 0.000000e+00 : f32
    %27 = vector.broadcast %cst_9 : f32 to vector<8x32x256xf32>
    %28 = arith.maximumf %27, %26 : vector<8x32x256xf32>
    %29 = vector.shape_cast %28 : vector<8x32x256xf32> to vector<256x256xf32>
    %c0_10 = arith.constant 0 : index
    %c0_11 = arith.constant 0 : index
    %30 = vector.load %arg5[%c0_10, %c0_11] : memref<2x256xf32, #tpu.memory_space<vmem>>, vector<2x256xf32>
    %c0_12 = arith.constant 0 : index
    %c0_13 = arith.constant 0 : index
    %31 = vector.load %arg4[%c0_12, %c0_13] : memref<2x256xf32, #tpu.memory_space<vmem>>, vector<2x256xf32>
    %cst_14 = arith.constant dense<0.000000e+00> : vector<2x256xf32>
    %32 = tpu.matmul %31, %29, %cst_14 {dimension_numbers = #tpu.dot_dimension_numbers<[1], [0], [0], [1], [0, 0, 1, 1], [], []>, precision = #tpu.contract_precision<fp32>} : vector<2x256xf32>, vector<256x256xf32>, vector<2x256xf32> -> vector<2x256xf32>
    %33 = arith.addf %30, %32 : vector<2x256xf32>
    %c0_15 = arith.constant 0 : index
    %c0_16 = arith.constant 0 : index
    %34 = vector.load %arg5[%c0_15, %c0_16] : memref<2x256xf32, #tpu.memory_space<vmem>>, vector<2x256xf32>
    tpu.vector_store %arg5[%c0_15, %c0_16], %33 {strides = array<i32>} : memref<2x256xf32, #tpu.memory_space<vmem>>, vector<2x256xf32>,
    return
  }
  func.func @transform_0(%arg0: i32, %arg1: i32) -> (i32, i32) {
    %c0_i32 = arith.constant 0 : i32
    %c0_i32_0 = arith.constant 0 : i32
    return %arg1, %c0_i32 : i32, i32
  }
  func.func @transform_1(%arg0: i32, %arg1: i32) -> (i32, i32) {
    %c0_i32 = arith.constant 0 : i32
    %c0_i32_0 = arith.constant 0 : i32
    return %c0_i32, %arg0 : i32, i32
  }
  func.func @transform_2(%arg0: i32, %arg1: i32) -> (i32, i32) {
    %c0_i32 = arith.constant 0 : i32
    %c0_i32_0 = arith.constant 0 : i32
    return %c0_i32, %arg1 : i32, i32
  }
  func.func @transform_3(%arg0: i32, %arg1: i32) -> (i32, i32) {
    %c0_i32 = arith.constant 0 : i32
    %c0_i32_0 = arith.constant 0 : i32
    return %c0_i32, %arg0 : i32, i32
  }
}

</mosaic_0001>

<llo_original>
// kernel: tpu_custom_call.1
$region0: #{tpu_custom_call.1}
  #allocation0 [shape = 'u32[]', space=smem, size = 0x4, offset = 0x4, fixed_abs, tag = 'smem constant byte address 0x4 - core index']
  #allocation1 [shape = 'u32[144,128]{1,0:T(1,128)}', space=vmem, size = 0x12000, scoped, tag = 'internal scratch']
  %s0 = inlined_call_operand.vmem [shape: f32[16,2], index: 0, kind: input, shape index: {}]
  %s1 = inlined_call_operand.vmem [shape: f32[2,256], index: 1, kind: input, shape index: {}]
  %s2 = inlined_call_operand.vmem [shape: f32[2,512], index: 2, kind: input, shape index: {}]
  %s3 = inlined_call_operand.hbm [shape: f32[2,256], index: 3, kind: output, shape index: {}]
  %s4 = sld [smem:[#allocation0]]
  $region49: #{tpu_custom_call.1} parent=0
    _
  %s6 = ssub.s32 1, %s4
  %s7 = scalar_select 0, %s6, %s4
  $region1: #{tpu_custom_call.1} parent=0
    #allocation2 [shape = 'u8[2048]{0}', space=vmem, size = 0x800, scoped, tag = 'output window, operand 0, single buffered']
    #allocation3 [shape = 's32[2]{0}', space=sflag, size = 0x8, scoped, tag = 'scoped memory for tpu_custom_call.1']
    %8 = vsyncpa [#allocation3], 0
    loop: start=0, step=1, limit=4
    $region2: #{tpu_custom_call.1} parent=1 // loop_pre_header
      _
    $region3: #{tpu_custom_call.1} parent=1 // loop_header
      %s10 = sphi 0, %s14
      %p11 = scmp.ge.s32.totalorder %s10, 4
      %s17 = sphi 0, %s29
      %s18 = sphi 0, %s25
      %s19 = sphi 0, %s17
      %s20 = sphi 0, %s18
      %s21 = sphi 0, %s19
      %s22 = sphi 0, %s20
      %s32 = sphi 0, %s34
      %s35 = sphi 0, %s32
      %s36 = sphi 0, %s35
      %s52 = sphi 0, %s36
      %s58 = sphi 0, %s60
      %s61 = sphi 0, %s58
      %s62 = sphi 0, %s61
      %s78 = sphi 0, %s62
      %s84 = sphi 0, %s86
      %s87 = sphi 0, %s84
      %s88 = sphi 0, %s87
      %s104 = sphi 0, %s88
      %s110 = sphi 0, %s112
      %s113 = sphi 0, %s110
      %s114 = sphi 0, %s113
      %s130 = sphi 0, %s114
    $region4: #{tpu_custom_call.1} parent=1 // loop_header_branch
      %13 = sbr.rel (%p11) target = $region8
    $region5: #{tpu_custom_call.1} parent=1 // loop_body
      %s15 = ssub.s32 %s10, 1
      %s16 = ssub.s32 %s10, 2
      %s23 = sadd.s32 1, %s18
      %p24 = scmp.ge.s32.totalorder %s23, 2
      %s25 = scalar_select %p24, 0, %s23
      %s26 = sadd.s32 1, %s17
      %s27 = scalar_select %p24, %s26, %s17
      %p28 = scmp.ge.s32.totalorder %s27, 1
      %s29 = scalar_select %p28, 0, %s27
      %s30 = ssub.s32 %s18, %s25
      %p31 = scmp.eq.s32.totalorder %s30, 0
      %s33 = sadd.s32 %s32, 1
      %s34 = scalar_select %p31, %s32, %s33
      %p37 = pneg %p31
      %p38 = scmp.eq.s32.totalorder %s10, 1
      %p39 = por %p37, %p38
      %p40 = scmp.ne.s32.totalorder %s32, %s35
      %p41 = scmp.eq.s32.totalorder %s10, 0
      %p42 = por %p40, %p41
      %p43 = scmp.ne.s32.totalorder %s32, %s35
      %p44 = scmp.eq.s32.totalorder %s15, 1
      %p45 = por %p43, %p44
      %p46 = scmp.ne.s32.totalorder %s35, %s36
      %p47 = scmp.eq.s32.totalorder %s15, 0
      %p48 = por %p46, %p47
      %p49 = scmp.ne.s32.totalorder %s35, %s36
      %p50 = scmp.eq.s32.totalorder %s16, 1
      %p51 = por %p49, %p50
      %p53 = scmp.ne.s32.totalorder %s36, %s52
      %p54 = scmp.eq.s32.totalorder %s16, 0
      %p55 = por %p53, %p54
      %s56 = ssub.s32 %s17, %s29
      %p57 = scmp.eq.s32.totalorder %s56, 0
      %s59 = sadd.s32 %s58, 1
      %s60 = scalar_select %p57, %s58, %s59
      %p63 = pneg %p57
      %p64 = scmp.eq.s32.totalorder %s10, 1
      %p65 = por %p63, %p64
      %p66 = scmp.ne.s32.totalorder %s58, %s61
      %p67 = scmp.eq.s32.totalorder %s10, 0
      %p68 = por %p66, %p67
      %p69 = scmp.ne.s32.totalorder %s58, %s61
      %p70 = scmp.eq.s32.totalorder %s15, 1
      %p71 = por %p69, %p70
      %p72 = scmp.ne.s32.totalorder %s61, %s62
      %p73 = scmp.eq.s32.totalorder %s15, 0
      %p74 = por %p72, %p73
      %p75 = scmp.ne.s32.totalorder %s61, %s62
      %p76 = scmp.eq.s32.totalorder %s16, 1
      %p77 = por %p75, %p76
      %p79 = scmp.ne.s32.totalorder %s62, %s78
      %p80 = scmp.eq.s32.totalorder %s16, 0
      %p81 = por %p79, %p80
      %s82 = ssub.s32 %s18, %s25
      %p83 = scmp.eq.s32.totalorder %s82, 0
      %s85 = sadd.s32 %s84, 1
      %s86 = scalar_select %p83, %s84, %s85
      %p89 = pneg %p83
      %p90 = scmp.eq.s32.totalorder %s10, 1
      %p91 = por %p89, %p90
      %p92 = scmp.ne.s32.totalorder %s84, %s87
      %p93 = scmp.eq.s32.totalorder %s10, 0
      %p94 = por %p92, %p93
      %p95 = scmp.ne.s32.totalorder %s84, %s87
      %p96 = scmp.eq.s32.totalorder %s15, 1
      %p97 = por %p95, %p96
      %p98 = scmp.ne.s32.totalorder %s87, %s88
      %p99 = scmp.eq.s32.totalorder %s15, 0
      %p100 = por %p98, %p99
      %p101 = scmp.ne.s32.totalorder %s87, %s88
      %p102 = scmp.eq.s32.totalorder %s16, 1
      %p103 = por %p101, %p102
      %p105 = scmp.ne.s32.totalorder %s88, %s104
      %p106 = scmp.eq.s32.totalorder %s16, 0
      %p107 = por %p105, %p106
      %s108 = ssub.s32 %s17, %s29
      %p109 = scmp.eq.s32.totalorder %s108, 0
      %s111 = sadd.s32 %s110, 1
      %s112 = scalar_select %p109, %s110, %s111
      %p115 = pneg %p109
      %p116 = scmp.eq.s32.totalorder %s10, 1
      %p117 = por %p115, %p116
      %p118 = scmp.ne.s32.totalorder %s110, %s113
      %p119 = scmp.eq.s32.totalorder %s10, 0
      %p120 = por %p118, %p119
      %p121 = scmp.ne.s32.totalorder %s110, %s113
      %p122 = scmp.eq.s32.totalorder %s15, 1
      %p123 = por %p121, %p122
      %p124 = scmp.ne.s32.totalorder %s113, %s114
      %p125 = scmp.eq.s32.totalorder %s15, 0
      %p126 = por %p124, %p125
      %p127 = scmp.ne.s32.totalorder %s113, %s114
      %p128 = scmp.eq.s32.totalorder %s16, 1
      %p129 = por %p127, %p128
      %p131 = scmp.ne.s32.totalorder %s114, %s130
      %p132 = scmp.eq.s32.totalorder %s16, 0
      %p133 = por %p131, %p132
      %p134 = scmp.le.s32.totalorder 1, %s10
      %p135 = scmp.lt.s32.totalorder %s10, 3
      %p136 = pnand %p134, %p135
      %p137 = pneg %p136
      // Predicated region
      $region9: #{tpu_custom_call.1} parent=5 // pred_check
        _
      $region10: #{tpu_custom_call.1} parent=5 // pred_check_branch
        %139 = sbr.rel (%p136) target = $region12
      $region11: #{tpu_custom_call.1} parent=5 // pred_region
        %s140 = ssub.s32 %s10, 1
        // Predicated region
        $region13: #{tpu_custom_call.1} parent=11 // pred_check
          %p141 = pneg %p74
        $region14: #{tpu_custom_call.1} parent=11 // pred_check_branch
          %143 = sbr.rel (%p141) target = $region16
        $region15: #{tpu_custom_call.1} parent=11 // pred_region
          %s144 = smul.u32 2, %s19
          %p145 = scmp.lt.s32.totalorder %s144, 1
          %s146 = scalar_select %p145, %s144, 1
          %s147 = smul.addr %s146, 2
          %s148 = scalar_lea.vmem %s1, %s147
          %s149 = smul.u32 2, %s19
        $region16: #{tpu_custom_call.1} parent=11 // pred_fallthru
          _
      $region12: #{tpu_custom_call.1} parent=5 // pred_fallthru
        _
      %p150 = scmp.lt.s32.totalorder %s10, 2
      // Predicated region
      $region17: #{tpu_custom_call.1} parent=5 // pred_check
        %p151 = pneg %p150
      $region18: #{tpu_custom_call.1} parent=5 // pred_check_branch
        %153 = sbr.rel (%p151) target = $region20
      $region19: #{tpu_custom_call.1} parent=5 // pred_region
        // Predicated region
        $region21: #{tpu_custom_call.1} parent=19 // pred_check
          %p154 = pneg %p42
        $region22: #{tpu_custom_call.1} parent=19 // pred_check_branch
          %156 = sbr.rel (%p154) target = $region24
        $region23: #{tpu_custom_call.1} parent=19 // pred_region
          %p157 = scmp.lt.s32.totalorder %s18, 1
          %s158 = scalar_select %p157, %s18, 1
          %s159 = smul.addr %s158, 8
          %s160 = scalar_lea.vmem %s0, %s159
        $region24: #{tpu_custom_call.1} parent=19 // pred_fallthru
          _
        // Predicated region
        $region25: #{tpu_custom_call.1} parent=19 // pred_check
          %p161 = pneg %p94
        $region26: #{tpu_custom_call.1} parent=19 // pred_check_branch
          %163 = sbr.rel (%p161) target = $region28
        $region27: #{tpu_custom_call.1} parent=19 // pred_region
          %s164 = smul.u32 2, %s18
          %p165 = scmp.lt.s32.totalorder %s164, 3
          %s166 = scalar_select %p165, %s164, 3
          %s167 = smul.addr %s166, 2
          %s168 = scalar_lea.vmem %s2, %s167
          %s169 = smul.u32 2, %s18
        $region28: #{tpu_custom_call.1} parent=19 // pred_fallthru
          _
      $region20: #{tpu_custom_call.1} parent=5 // pred_fallthru
        _
      %p170 = scmp.le.s32.totalorder 1, %s10
      %p171 = scmp.lt.s32.totalorder %s10, 3
      %p172 = pnand %p170, %p171
      %p173 = pneg %p172
      // Predicated region
      $region29: #{tpu_custom_call.1} parent=5 // pred_check
        _
      $region30: #{tpu_custom_call.1} parent=5 // pred_check_branch
        %175 = sbr.rel (%p172) target = $region32
      $region31: #{tpu_custom_call.1} parent=5 // pred_region
        %s176 = ssub.s32 %s10, 1
        %p177 = scmp.lt.s32.totalorder %s20, 1
        %s178 = scalar_select %p177, %s20, 1
        %s179 = smul.addr %s178, 8
        %s180 = scalar_lea.vmem %s0, %s179
        %p181 = pneg %p48
        %p182 = pneg %p45
        %s183 = smul.u32 2, %s19
        %p184 = scmp.lt.s32.totalorder %s183, 1
        %s185 = scalar_select %p184, %s183, 1
        %s186 = smul.addr %s185, 2
        %s187 = scalar_lea.vmem %s1, %s186
        %p188 = pneg %p74
        %p189 = pneg %p71
        %s190 = smul.u32 2, %s20
        %p191 = scmp.lt.s32.totalorder %s190, 3
        %s192 = scalar_select %p191, %s190, 3
        %s193 = smul.addr %s192, 2
        %s194 = scalar_lea.vmem %s2, %s193
        %p195 = pneg %p100
        %p196 = pneg %p97
        %p197 = pneg %p126
        %p198 = pneg %p123
        %p199 = scmp.lt.s32.totalorder %s20, 1
        %s200 = scalar_select %p199, %s20, 1
        %s201 = smul.addr %s200, 8
        %s202 = scalar_lea.vmem %s0, %s201
        %s203 = smul.u32 2, %s19
        %p204 = scmp.lt.s32.totalorder %s203, 1
        %s205 = scalar_select %p204, %s203, 1
        %s206 = smul.addr %s205, 2
        %s207 = scalar_lea.vmem %s1, %s206
        %s208 = smul.u32 2, %s19
        %s209 = smul.u32 2, %s20
        %p210 = scmp.lt.s32.totalorder %s209, 3
        %s211 = scalar_select %p210, %s209, 3
        %s212 = smul.addr %s211, 2
        %s213 = scalar_lea.vmem %s2, %s212
        %s214 = smul.u32 2, %s20
        %s215 = smul.u32 2, %s19
        %p216 = scmp.eq.s32.totalorder %s20, 0
        // Predicated region
        $region33: #{tpu_custom_call.1} parent=31 // pred_check
          %p217 = pneg %p216
        $region34: #{tpu_custom_call.1} parent=31 // pred_check_branch
          %219 = sbr.rel (%p217) target = $region36
        $region35: #{tpu_custom_call.1} parent=31 // pred_region
          %220 = vst [vmem:[#allocation2] sm:$0xf] 0.0
        $region36: #{tpu_custom_call.1} parent=31 // pred_fallthru
          _
        %v221 = vld [vmem:[%s207] ss:$2 sm:$0x3]
        %s222 = scalar_lea.vmem %s207, 1
        %v223 = vld [vmem:[%s222] ss:$2 sm:$0x3]
        %v224 = vld [vmem:[%s202] sm:$0xff]
        %226 = vset.pattern.permute.xlu0 0
        %227 = vperm.xlu0 %226, %v224
        %v228 = vpop.permute.xlu0 %227
        %v231 = vlaneseq
        %v232 = vshrl.u32 %v231, 7
        %v233 = vsub.s32 0, %v232
        %v234 = vrot.slane %v221, %v233
        %v235 = vlaneseq
        %v236 = vshrl.u32 %v235, 7
        %v237 = vsub.s32 1, %v236
        %v238 = vrot.slane %v221, %v237
        %v241 = vmul.f32 %v228, %v234
        %v242 = vmul.f32 %v228, %v238
        %243 = vset.pattern.permute.xlu0 1
        %244 = vperm.xlu0 %243, %v224
        %v245 = vpop.permute.xlu0 %244
        %v248 = vlaneseq
        %v249 = vshrl.u32 %v248, 7
        %v250 = vsub.s32 0, %v249
        %v251 = vrot.slane %v223, %v250
        %v252 = vlaneseq
        %v253 = vshrl.u32 %v252, 7
        %v254 = vsub.s32 1, %v253
        %v255 = vrot.slane %v223, %v254
        %v258 = vmul.f32 %v245, %v251
        %v259 = vmul.f32 %v245, %v255
        %v260 = vadd.f32 %v241, %v258
        %v261 = vadd.f32 %v242, %v259
        %v262 = vadd.f32 %v260, 15.5
        %v263 = vadd.f32 %v261, 15.5
        %v264 = vlaneseq
        %v265 = vshrl.u32 %v264, 7
        %v266 = vadd.s32 %v265, 8
        %v267 = vadd.s32 %v265, 16
        %v268 = vadd.s32 %v265, 24
        %v269 = vcvt.s32.f32 %v265
        %v270 = vcvt.s32.f32 %v266
        %v271 = vcvt.s32.f32 %v267
        %v272 = vcvt.s32.f32 %v268
        %v275 = vcombine.low %v262, %v263
        %v276 = vcombine.high %v262, %v263
        %v278 = vunpack.c.l.s4 1966171168
        %v279 = vunpack.c.0.s8 %v278
        %v280 = vlaneseq
        %v281 = vshrl.u32 %v280, 7
        %v282 = vsub.s32 %v279, %v281
        %v283 = vrot.slane %v275, %v282
        %v285 = vunpack.c.l.s4 1966171168
        %v286 = vunpack.c.0.s8 %v285
        %v287 = vlaneseq
        %v288 = vshrl.u32 %v287, 7
        %v289 = vsub.s32 %v286, %v288
        %v290 = vrot.slane %v276, %v289
        %v291 = vcombine.high %v283, %v283
        %v292 = vcombine.high %v290, %v290
        %v294 = vunpack.c.l.s4 1966171168
        %v295 = vunpack.c.0.s8 %v294
        %v296 = vlaneseq
        %v297 = vshrl.u32 %v296, 7
        %v298 = vsub.s32 %v295, %v297
        %v299 = vrot.slane %v283, %v298
        %v301 = vunpack.c.l.s4 1966171168
        %v302 = vunpack.c.0.s8 %v301
        %v303 = vlaneseq
        %v304 = vshrl.u32 %v303, 7
        %v305 = vsub.s32 %v302, %v304
        %v306 = vrot.slane %v290, %v305
        %v308 = vunpack.c.l.s4 1966171168
        %v309 = vunpack.c.0.s8 %v308
        %v310 = vlaneseq
        %v311 = vshrl.u32 %v310, 7
        %v312 = vsub.s32 %v309, %v311
        %v313 = vrot.slane %v291, %v312
        %v315 = vunpack.c.l.s4 1966171168
        %v316 = vunpack.c.0.s8 %v315
        %v317 = vlaneseq
        %v318 = vshrl.u32 %v317, 7
        %v319 = vsub.s32 %v316, %v318
        %v320 = vrot.slane %v292, %v319
        %v321 = vcombine.high %v299, %v299
        %v322 = vcombine.high %v306, %v306
        %v323 = vcombine.high %v313, %v313
        %v324 = vcombine.high %v320, %v320
        %v325 = vlaneseq
        %v326 = vshrl.u32 %v325, 7
        %v327 = vsub.s32 0, %v326
        %v328 = vrot.slane %v299, %v327
        %v329 = vlaneseq
        %v330 = vshrl.u32 %v329, 7
        %v331 = vsub.s32 1, %v330
        %v332 = vrot.slane %v299, %v331
        %v333 = vlaneseq
        %v334 = vshrl.u32 %v333, 7
        %v335 = vsub.s32 0, %v334
        %v336 = vrot.slane %v313, %v335
        %v337 = vlaneseq
        %v338 = vshrl.u32 %v337, 7
        %v339 = vsub.s32 1, %v338
        %v340 = vrot.slane %v313, %v339
        %v341 = vlaneseq
        %v342 = vshrl.u32 %v341, 7
        %v343 = vsub.s32 0, %v342
        %v344 = vrot.slane %v321, %v343
        %v345 = vlaneseq
        %v346 = vshrl.u32 %v345, 7
        %v347 = vsub.s32 1, %v346
        %v348 = vrot.slane %v321, %v347
        %v349 = vlaneseq
        %v350 = vshrl.u32 %v349, 7
        %v351 = vsub.s32 0, %v350
        %v352 = vrot.slane %v323, %v351
        %v353 = vlaneseq
        %v354 = vshrl.u32 %v353, 7
        %v355 = vsub.s32 1, %v354
        %v356 = vrot.slane %v323, %v355
        %v357 = vlaneseq
        %v358 = vshrl.u32 %v357, 7
        %v359 = vsub.s32 0, %v358
        %v360 = vrot.slane %v306, %v359
        %v361 = vlaneseq
        %v362 = vshrl.u32 %v361, 7
        %v363 = vsub.s32 1, %v362
        %v364 = vrot.slane %v306, %v363
        %v365 = vlaneseq
        %v366 = vshrl.u32 %v365, 7
        %v367 = vsub.s32 0, %v366
        %v368 = vrot.slane %v320, %v367
        %v369 = vlaneseq
        %v370 = vshrl.u32 %v369, 7
        %v371 = vsub.s32 1, %v370
        %v372 = vrot.slane %v320, %v371
        %v373 = vlaneseq
        %v374 = vshrl.u32 %v373, 7
        %v375 = vsub.s32 0, %v374
        %v376 = vrot.slane %v322, %v375
        %v377 = vlaneseq
        %v378 = vshrl.u32 %v377, 7
        %v379 = vsub.s32 1, %v378
        %v380 = vrot.slane %v322, %v379
        %v381 = vlaneseq
        %v382 = vshrl.u32 %v381, 7
        %v383 = vsub.s32 0, %v382
        %v384 = vrot.slane %v324, %v383
        %v385 = vlaneseq
        %v386 = vshrl.u32 %v385, 7
        %v387 = vsub.s32 1, %v386
        %v388 = vrot.slane %v324, %v387
        %v405 = vsub.f32 %v328, %v269
        %v406 = vsub.f32 %v332, %v269
        %v407 = vsub.f32 %v328, %v270
        %v408 = vsub.f32 %v332, %v270
        %v409 = vsub.f32 %v328, %v271
        %v410 = vsub.f32 %v332, %v271
        %v411 = vsub.f32 %v328, %v272
        %v412 = vsub.f32 %v332, %v272
        %v413 = vsub.f32 %v336, %v269
        %v414 = vsub.f32 %v340, %v269
        %v415 = vsub.f32 %v336, %v270
        %v416 = vsub.f32 %v340, %v270
        %v417 = vsub.f32 %v336, %v271
        %v418 = vsub.f32 %v340, %v271
        %v419 = vsub.f32 %v336, %v272
        %v420 = vsub.f32 %v340, %v272
        %v421 = vsub.f32 %v344, %v269
        %v422 = vsub.f32 %v348, %v269
        %v423 = vsub.f32 %v344, %v270
        %v424 = vsub.f32 %v348, %v270
        %v425 = vsub.f32 %v344, %v271
        %v426 = vsub.f32 %v348, %v271
        %v427 = vsub.f32 %v344, %v272
        %v428 = vsub.f32 %v348, %v272
        %v429 = vsub.f32 %v352, %v269
        %v430 = vsub.f32 %v356, %v269
        %v431 = vsub.f32 %v352, %v270
        %v432 = vsub.f32 %v356, %v270
        %v433 = vsub.f32 %v352, %v271
        %v434 = vsub.f32 %v356, %v271
        %v435 = vsub.f32 %v352, %v272
        %v436 = vsub.f32 %v356, %v272
        %v437 = vsub.f32 %v360, %v269
        %v438 = vsub.f32 %v364, %v269
        %v439 = vsub.f32 %v360, %v270
        %v440 = vsub.f32 %v364, %v270
        %v441 = vsub.f32 %v360, %v271
        %v442 = vsub.f32 %v364, %v271
        %v443 = vsub.f32 %v360, %v272
        %v444 = vsub.f32 %v364, %v272
        %v445 = vsub.f32 %v368, %v269
        %v446 = vsub.f32 %v372, %v269
        %v447 = vsub.f32 %v368, %v270
        %v448 = vsub.f32 %v372, %v270
        %v449 = vsub.f32 %v368, %v271
        %v450 = vsub.f32 %v372, %v271
        %v451 = vsub.f32 %v368, %v272
        %v452 = vsub.f32 %v372, %v272
        %v453 = vsub.f32 %v376, %v269
        %v454 = vsub.f32 %v380, %v269
        %v455 = vsub.f32 %v376, %v270
        %v456 = vsub.f32 %v380, %v270
        %v457 = vsub.f32 %v376, %v271
        %v458 = vsub.f32 %v380, %v271
        %v459 = vsub.f32 %v376, %v272
        %v460 = vsub.f32 %v380, %v272
        %v461 = vsub.f32 %v384, %v269
        %v462 = vsub.f32 %v388, %v269
        %v463 = vsub.f32 %v384, %v270
        %v464 = vsub.f32 %v388, %v270
        %v465 = vsub.f32 %v384, %v271
        %v466 = vsub.f32 %v388, %v271
        %v467 = vsub.f32 %v384, %v272
        %v468 = vsub.f32 %v388, %v272
        %v469 = vand.u32 2147483647, %v405
        %v470 = vand.u32 2147483647, %v406
        %v471 = vand.u32 2147483647, %v407
        %v472 = vand.u32 2147483647, %v408
        %v473 = vand.u32 2147483647, %v409
        %v474 = vand.u32 2147483647, %v410
        %v475 = vand.u32 2147483647, %v411
        %v476 = vand.u32 2147483647, %v412
        %v477 = vand.u32 2147483647, %v413
        %v478 = vand.u32 2147483647, %v414
        %v479 = vand.u32 2147483647, %v415
        %v480 = vand.u32 2147483647, %v416
        %v481 = vand.u32 2147483647, %v417
        %v482 = vand.u32 2147483647, %v418
        %v483 = vand.u32 2147483647, %v419
        %v484 = vand.u32 2147483647, %v420
        %v485 = vand.u32 2147483647, %v421
        %v486 = vand.u32 2147483647, %v422
        %v487 = vand.u32 2147483647, %v423
        %v488 = vand.u32 2147483647, %v424
        %v489 = vand.u32 2147483647, %v425
        %v490 = vand.u32 2147483647, %v426
        %v491 = vand.u32 2147483647, %v427
        %v492 = vand.u32 2147483647, %v428
        %v493 = vand.u32 2147483647, %v429
        %v494 = vand.u32 2147483647, %v430
        %v495 = vand.u32 2147483647, %v431
        %v496 = vand.u32 2147483647, %v432
        %v497 = vand.u32 2147483647, %v433
        %v498 = vand.u32 2147483647, %v434
        %v499 = vand.u32 2147483647, %v435
        %v500 = vand.u32 2147483647, %v436
        %v501 = vand.u32 2147483647, %v437
        %v502 = vand.u32 2147483647, %v438
        %v503 = vand.u32 2147483647, %v439
        %v504 = vand.u32 2147483647, %v440
        %v505 = vand.u32 2147483647, %v441
        %v506 = vand.u32 2147483647, %v442
        %v507 = vand.u32 2147483647, %v443
        %v508 = vand.u32 2147483647, %v444
        %v509 = vand.u32 2147483647, %v445
        %v510 = vand.u32 2147483647, %v446
        %v511 = vand.u32 2147483647, %v447
        %v512 = vand.u32 2147483647, %v448
        %v513 = vand.u32 2147483647, %v449
        %v514 = vand.u32 2147483647, %v450
        %v515 = vand.u32 2147483647, %v451
        %v516 = vand.u32 2147483647, %v452
        %v517 = vand.u32 2147483647, %v453
        %v518 = vand.u32 2147483647, %v454
        %v519 = vand.u32 2147483647, %v455
        %v520 = vand.u32 2147483647, %v456
        %v521 = vand.u32 2147483647, %v457
        %v522 = vand.u32 2147483647, %v458
        %v523 = vand.u32 2147483647, %v459
        %v524 = vand.u32 2147483647, %v460
        %v525 = vand.u32 2147483647, %v461
        %v526 = vand.u32 2147483647, %v462
        %v527 = vand.u32 2147483647, %v463
        %v528 = vand.u32 2147483647, %v464
        %v529 = vand.u32 2147483647, %v465
        %v530 = vand.u32 2147483647, %v466
        %v531 = vand.u32 2147483647, %v467
        %v532 = vand.u32 2147483647, %v468
        %v533 = vsub.f32 1.0, %v469
        %v534 = vsub.f32 1.0, %v470
        %v535 = vsub.f32 1.0, %v471
        %v536 = vsub.f32 1.0, %v472
        %v537 = vsub.f32 1.0, %v473
        %v538 = vsub.f32 1.0, %v474
        %v539 = vsub.f32 1.0, %v475
        %v540 = vsub.f32 1.0, %v476
        %v541 = vsub.f32 1.0, %v477
        %v542 = vsub.f32 1.0, %v478
        %v543 = vsub.f32 1.0, %v479
        %v544 = vsub.f32 1.0, %v480
        %v545 = vsub.f32 1.0, %v481
        %v546 = vsub.f32 1.0, %v482
        %v547 = vsub.f32 1.0, %v483
        %v548 = vsub.f32 1.0, %v484
        %v549 = vsub.f32 1.0, %v485
        %v550 = vsub.f32 1.0, %v486
        %v551 = vsub.f32 1.0, %v487
        %v552 = vsub.f32 1.0, %v488
        %v553 = vsub.f32 1.0, %v489
        %v554 = vsub.f32 1.0, %v490
        %v555 = vsub.f32 1.0, %v491
        %v556 = vsub.f32 1.0, %v492
        %v557 = vsub.f32 1.0, %v493
        %v558 = vsub.f32 1.0, %v494
        %v559 = vsub.f32 1.0, %v495
        %v560 = vsub.f32 1.0, %v496
        %v561 = vsub.f32 1.0, %v497
        %v562 = vsub.f32 1.0, %v498
        %v563 = vsub.f32 1.0, %v499
        %v564 = vsub.f32 1.0, %v500
        %v565 = vsub.f32 1.0, %v501
        %v566 = vsub.f32 1.0, %v502
        %v567 = vsub.f32 1.0, %v503
        %v568 = vsub.f32 1.0, %v504
        %v569 = vsub.f32 1.0, %v505
        %v570 = vsub.f32 1.0, %v506
        %v571 = vsub.f32 1.0, %v507
        %v572 = vsub.f32 1.0, %v508
        %v573 = vsub.f32 1.0, %v509
        %v574 = vsub.f32 1.0, %v510
        %v575 = vsub.f32 1.0, %v511
        %v576 = vsub.f32 1.0, %v512
        %v577 = vsub.f32 1.0, %v513
        %v578 = vsub.f32 1.0, %v514
        %v579 = vsub.f32 1.0, %v515
        %v580 = vsub.f32 1.0, %v516
        %v581 = vsub.f32 1.0, %v517
        %v582 = vsub.f32 1.0, %v518
        %v583 = vsub.f32 1.0, %v519
        %v584 = vsub.f32 1.0, %v520
        %v585 = vsub.f32 1.0, %v521
        %v586 = vsub.f32 1.0, %v522
        %v587 = vsub.f32 1.0, %v523
        %v588 = vsub.f32 1.0, %v524
        %v589 = vsub.f32 1.0, %v525
        %v590 = vsub.f32 1.0, %v526
        %v591 = vsub.f32 1.0, %v527
        %v592 = vsub.f32 1.0, %v528
        %v593 = vsub.f32 1.0, %v529
        %v594 = vsub.f32 1.0, %v530
        %v595 = vsub.f32 1.0, %v531
        %v596 = vsub.f32 1.0, %v532
        %v597 = vmax.f32 %v533, 0.0
        %v598 = vmax.f32 %v534, 0.0
        %v599 = vmax.f32 %v535, 0.0
        %v600 = vmax.f32 %v536, 0.0
        %v601 = vmax.f32 %v537, 0.0
        %v602 = vmax.f32 %v538, 0.0
        %v603 = vmax.f32 %v539, 0.0
        %v604 = vmax.f32 %v540, 0.0
        %v605 = vmax.f32 %v541, 0.0
        %v606 = vmax.f32 %v542, 0.0
        %v607 = vmax.f32 %v543, 0.0
        %v608 = vmax.f32 %v544, 0.0
        %v609 = vmax.f32 %v545, 0.0
        %v610 = vmax.f32 %v546, 0.0
        %v611 = vmax.f32 %v547, 0.0
        %v612 = vmax.f32 %v548, 0.0
        %v613 = vmax.f32 %v549, 0.0
        %v614 = vmax.f32 %v550, 0.0
        %v615 = vmax.f32 %v551, 0.0
        %v616 = vmax.f32 %v552, 0.0
        %v617 = vmax.f32 %v553, 0.0
        %v618 = vmax.f32 %v554, 0.0
        %v619 = vmax.f32 %v555, 0.0
        %v620 = vmax.f32 %v556, 0.0
        %v621 = vmax.f32 %v557, 0.0
        %v622 = vmax.f32 %v558, 0.0
        %v623 = vmax.f32 %v559, 0.0
        %v624 = vmax.f32 %v560, 0.0
        %v625 = vmax.f32 %v561, 0.0
        %v626 = vmax.f32 %v562, 0.0
        %v627 = vmax.f32 %v563, 0.0
        %v628 = vmax.f32 %v564, 0.0
        %v629 = vmax.f32 %v565, 0.0
        %v630 = vmax.f32 %v566, 0.0
        %v631 = vmax.f32 %v567, 0.0
        %v632 = vmax.f32 %v568, 0.0
        %v633 = vmax.f32 %v569, 0.0
        %v634 = vmax.f32 %v570, 0.0
        %v635 = vmax.f32 %v571, 0.0
        %v636 = vmax.f32 %v572, 0.0
        %v637 = vmax.f32 %v573, 0.0
        %v638 = vmax.f32 %v574, 0.0
        %v639 = vmax.f32 %v575, 0.0
        %v640 = vmax.f32 %v576, 0.0
        %v641 = vmax.f32 %v577, 0.0
        %v642 = vmax.f32 %v578, 0.0
        %v643 = vmax.f32 %v579, 0.0
        %v644 = vmax.f32 %v580, 0.0
        %v645 = vmax.f32 %v581, 0.0
        %v646 = vmax.f32 %v582, 0.0
        %v647 = vmax.f32 %v583, 0.0
        %v648 = vmax.f32 %v584, 0.0
        %v649 = vmax.f32 %v585, 0.0
        %v650 = vmax.f32 %v586, 0.0
        %v651 = vmax.f32 %v587, 0.0
        %v652 = vmax.f32 %v588, 0.0
        %v653 = vmax.f32 %v589, 0.0
        %v654 = vmax.f32 %v590, 0.0
        %v655 = vmax.f32 %v591, 0.0
        %v656 = vmax.f32 %v592, 0.0
        %v657 = vmax.f32 %v593, 0.0
        %v658 = vmax.f32 %v594, 0.0
        %v659 = vmax.f32 %v595, 0.0
        %v660 = vmax.f32 %v596, 0.0
        %v661 = vld [vmem:[#allocation2] sm:$0xf]
        %v662 = vld [vmem:[%s213] sm:$0xf]
        %v665 = vunpack.c.l.s4 1983009808
        %v666 = vunpack.c.0.s8 %v665
        %v667 = vlaneseq
        %v668 = vshrl.u32 %v667, 7
        %v669 = vsub.s32 %v666, %v668
        %v670 = vrot.slane %v662, %v669
        %v671 = vcombine.high %v670, %v670
        %v674 = vand.u32 %v598, 4294901760
        %675 = vmatprep.subr.mxu0 %v674
        %v676 = vand.u32 %v597, 4294901760
        %677 = vmatpush1.msra.mxu0 %v676
        %v678 = vand.u32 %v600, 4294901760
        %679 = vmatprep.subr.mxu0 %v678
        %v680 = vand.u32 %v599, 4294901760
        %681 = vmatpush1.msra.mxu0 %v680
        %v682 = vand.u32 %v602, 4294901760
        %683 = vmatprep.subr.mxu0 %v682
        %v684 = vand.u32 %v601, 4294901760
        %685 = vmatpush1.msra.mxu0 %v684
        %v686 = vand.u32 %v604, 4294901760
        %687 = vmatprep.subr.mxu0 %v686
        %v688 = vand.u32 %v603, 4294901760
        %689 = vmatpush1.msra.mxu0 %v688
        %v690 = vand.u32 %v606, 4294901760
        %691 = vmatprep.subr.mxu0 %v690
        %v692 = vand.u32 %v605, 4294901760
        %693 = vmatpush1.msra.mxu0 %v692
        %v694 = vand.u32 %v608, 4294901760
        %695 = vmatprep.subr.mxu0 %v694
        %v696 = vand.u32 %v607, 4294901760
        %697 = vmatpush1.msra.mxu0 %v696
        %v698 = vand.u32 %v610, 4294901760
        %699 = vmatprep.subr.mxu0 %v698
        %v700 = vand.u32 %v609, 4294901760
        %701 = vmatpush1.msra.mxu0 %v700
        %v702 = vand.u32 %v612, 4294901760
        %703 = vmatprep.subr.mxu0 %v702
        %v704 = vand.u32 %v611, 4294901760
        %705 = vmatpush1.msra.mxu0 %v704
        %v706 = vand.u32 %v614, 4294901760
        %707 = vmatprep.subr.mxu0 %v706
        %v708 = vand.u32 %v613, 4294901760
        %709 = vmatpush1.msra.mxu0 %v708
        %v710 = vand.u32 %v616, 4294901760
        %711 = vmatprep.subr.mxu0 %v710
        %v712 = vand.u32 %v615, 4294901760
        %713 = vmatpush1.msra.mxu0 %v712
        %v714 = vand.u32 %v618, 4294901760
        %715 = vmatprep.subr.mxu0 %v714
        %v716 = vand.u32 %v617, 4294901760
        %717 = vmatpush1.msra.mxu0 %v716
        %v718 = vand.u32 %v620, 4294901760
        %719 = vmatprep.subr.mxu0 %v718
        %v720 = vand.u32 %v619, 4294901760
        %721 = vmatpush1.msra.mxu0 %v720
        %v722 = vand.u32 %v622, 4294901760
        %723 = vmatprep.subr.mxu0 %v722
        %v724 = vand.u32 %v621, 4294901760
        %725 = vmatpush1.msra.mxu0 %v724
        %v726 = vand.u32 %v624, 4294901760
        %727 = vmatprep.subr.mxu0 %v726
        %v728 = vand.u32 %v623, 4294901760
        %729 = vmatpush1.msra.mxu0 %v728
        %v730 = vand.u32 %v626, 4294901760
        %731 = vmatprep.subr.mxu0 %v730
        %v732 = vand.u32 %v625, 4294901760
        %733 = vmatpush1.msra.mxu0 %v732
        %v734 = vand.u32 %v628, 4294901760
        %735 = vmatprep.subr.mxu0 %v734
        %v736 = vand.u32 %v627, 4294901760
        %737 = vmatpush1.msra.mxu0 %v736
        %v738 = vand.u32 %v630, 4294901760
        %739 = vmatprep.subr.mxu0 %v738
        %v740 = vand.u32 %v629, 4294901760
        %741 = vmatpush1.msra.mxu0 %v740
        %v742 = vand.u32 %v632, 4294901760
        %743 = vmatprep.subr.mxu0 %v742
        %v744 = vand.u32 %v631, 4294901760
        %745 = vmatpush1.msra.mxu0 %v744
        %v746 = vand.u32 %v634, 4294901760
        %747 = vmatprep.subr.mxu0 %v746
        %v748 = vand.u32 %v633, 4294901760
        %749 = vmatpush1.msra.mxu0 %v748
        %v750 = vand.u32 %v636, 4294901760
        %751 = vmatprep.subr.mxu0 %v750
        %v752 = vand.u32 %v635, 4294901760
        %753 = vmatpush1.msra.mxu0 %v752
        %v754 = vand.u32 %v638, 4294901760
        %755 = vmatprep.subr.mxu0 %v754
        %v756 = vand.u32 %v637, 4294901760
        %757 = vmatpush1.msra.mxu0 %v756
        %v758 = vand.u32 %v640, 4294901760
        %759 = vmatprep.subr.mxu0 %v758
        %v760 = vand.u32 %v639, 4294901760
        %761 = vmatpush1.msra.mxu0 %v760
        %v762 = vand.u32 %v642, 4294901760
        %763 = vmatprep.subr.mxu0 %v762
        %v764 = vand.u32 %v641, 4294901760
        %765 = vmatpush1.msra.mxu0 %v764
        %v766 = vand.u32 %v644, 4294901760
        %767 = vmatprep.subr.mxu0 %v766
        %v768 = vand.u32 %v643, 4294901760
        %769 = vmatpush1.msra.mxu0 %v768
        %v770 = vand.u32 %v646, 4294901760
        %771 = vmatprep.subr.mxu0 %v770
        %v772 = vand.u32 %v645, 4294901760
        %773 = vmatpush1.msra.mxu0 %v772
        %v774 = vand.u32 %v648, 4294901760
        %775 = vmatprep.subr.mxu0 %v774
        %v776 = vand.u32 %v647, 4294901760
        %777 = vmatpush1.msra.mxu0 %v776
        %v778 = vand.u32 %v650, 4294901760
        %779 = vmatprep.subr.mxu0 %v778
        %v780 = vand.u32 %v649, 4294901760
        %781 = vmatpush1.msra.mxu0 %v780
        %v782 = vand.u32 %v652, 4294901760
        %783 = vmatprep.subr.mxu0 %v782
        %v784 = vand.u32 %v651, 4294901760
        %785 = vmatpush1.msra.mxu0 %v784
        %v786 = vand.u32 %v654, 4294901760
        %787 = vmatprep.subr.mxu0 %v786
        %v788 = vand.u32 %v653, 4294901760
        %789 = vmatpush1.msra.mxu0 %v788
        %v790 = vand.u32 %v656, 4294901760
        %791 = vmatprep.subr.mxu0 %v790
        %v792 = vand.u32 %v655, 4294901760
        %793 = vmatpush1.msra.mxu0 %v792
        %v794 = vand.u32 %v658, 4294901760
        %795 = vmatprep.subr.mxu0 %v794
        %v796 = vand.u32 %v657, 4294901760
        %797 = vmatpush1.msra.mxu0 %v796
        %v798 = vand.u32 %v660, 4294901760
        %799 = vmatprep.subr.mxu0 %v798
        %v800 = vand.u32 %v659, 4294901760
        %801 = vmatpush1.msra.mxu0 %v800
        %v802 = vand.u32 %v671, 4294901760
        %v803 = vsub.f32 %v671, %v802
        %v804 = vand.u32 %v803, 4294901760
        %v805 = vsub.f32 %v803, %v804
        %v806 = vand.u32 %v805, 4294901760
        %807 = vmatprep.mubr.f32.mxu0 %v806
        %v808 = vand.u32 %v670, 4294901760
        %v809 = vsub.f32 %v670, %v808
        %v810 = vand.u32 %v809, 4294901760
        %v811 = vsub.f32 %v809, %v810
        %v812 = vand.u32 %v811, 4294901760
        %813 = vmatmul.mubr.f32.gmra.mrb[0].mxu0 %v812
        %v814 = vpop.f32.mrb[0].mxu0
        %v815 = vadd.f32 0.0, %v814
        %v816 = vpop.f32.mrb[0].mxu0
        %v817 = vadd.f32 0.0, %v816
        %818 = vdwg.mxu0
        %v819 = vand.u32 %v598, 4294901760
        %v820 = vsub.f32 %v598, %v819
        %v821 = vand.u32 %v820, 4294901760
        %v822 = vsub.f32 %v820, %v821
        %v823 = vand.u32 %v822, 4294901760
        %824 = vmatprep.subr.mxu0 %v823
        %v825 = vand.u32 %v597, 4294901760
        %v826 = vsub.f32 %v597, %v825
        %v827 = vand.u32 %v826, 4294901760
        %v828 = vsub.f32 %v826, %v827
        %v829 = vand.u32 %v828, 4294901760
        %830 = vmatpush1.msra.mxu0 %v829
        %v831 = vand.u32 %v600, 4294901760
        %v832 = vsub.f32 %v600, %v831
        %v833 = vand.u32 %v832, 4294901760
        %v834 = vsub.f32 %v832, %v833
        %v835 = vand.u32 %v834, 4294901760
        %836 = vmatprep.subr.mxu0 %v835
        %v837 = vand.u32 %v599, 4294901760
        %v838 = vsub.f32 %v599, %v837
        %v839 = vand.u32 %v838, 4294901760
        %v840 = vsub.f32 %v838, %v839
        %v841 = vand.u32 %v840, 4294901760
        %842 = vmatpush1.msra.mxu0 %v841
        %v843 = vand.u32 %v602, 4294901760
        %v844 = vsub.f32 %v602, %v843
        %v845 = vand.u32 %v844, 4294901760
        %v846 = vsub.f32 %v844, %v845
        %v847 = vand.u32 %v846, 4294901760
        %848 = vmatprep.subr.mxu0 %v847
        %v849 = vand.u32 %v601, 4294901760
        %v850 = vsub.f32 %v601, %v849
        %v851 = vand.u32 %v850, 4294901760
        %v852 = vsub.f32 %v850, %v851
        %v853 = vand.u32 %v852, 4294901760
        %854 = vmatpush1.msra.mxu0 %v853
        %v855 = vand.u32 %v604, 4294901760
        %v856 = vsub.f32 %v604, %v855
        %v857 = vand.u32 %v856, 4294901760
        %v858 = vsub.f32 %v856, %v857
        %v859 = vand.u32 %v858, 4294901760
        %860 = vmatprep.subr.mxu0 %v859
        %v861 = vand.u32 %v603, 4294901760
        %v862 = vsub.f32 %v603, %v861
        %v863 = vand.u32 %v862, 4294901760
        %v864 = vsub.f32 %v862, %v863
        %v865 = vand.u32 %v864, 4294901760
        %866 = vmatpush1.msra.mxu0 %v865
        %v867 = vand.u32 %v606, 4294901760
        %v868 = vsub.f32 %v606, %v867
        %v869 = vand.u32 %v868, 4294901760
        %v870 = vsub.f32 %v868, %v869
        %v871 = vand.u32 %v870, 4294901760
        %872 = vmatprep.subr.mxu0 %v871
        %v873 = vand.u32 %v605, 4294901760
        %v874 = vsub.f32 %v605, %v873
        %v875 = vand.u32 %v874, 4294901760
        %v876 = vsub.f32 %v874, %v875
        %v877 = vand.u32 %v876, 4294901760
        %878 = vmatpush1.msra.mxu0 %v877
        %v879 = vand.u32 %v608, 4294901760
        %v880 = vsub.f32 %v608, %v879
        %v881 = vand.u32 %v880, 4294901760
        %v882 = vsub.f32 %v880, %v881
        %v883 = vand.u32 %v882, 4294901760
        %884 = vmatprep.subr.mxu0 %v883
        %v885 = vand.u32 %v607, 4294901760
        %v886 = vsub.f32 %v607, %v885
        %v887 = vand.u32 %v886, 4294901760
        %v888 = vsub.f32 %v886, %v887
        %v889 = vand.u32 %v888, 4294901760
        %890 = vmatpush1.msra.mxu0 %v889
        %v891 = vand.u32 %v610, 4294901760
        %v892 = vsub.f32 %v610, %v891
        %v893 = vand.u32 %v892, 4294901760
        %v894 = vsub.f32 %v892, %v893
        %v895 = vand.u32 %v894, 4294901760
        %896 = vmatprep.subr.mxu0 %v895
        %v897 = vand.u32 %v609, 4294901760
        %v898 = vsub.f32 %v609, %v897
        %v899 = vand.u32 %v898, 4294901760
        %v900 = vsub.f32 %v898, %v899
        %v901 = vand.u32 %v900, 4294901760
        %902 = vmatpush1.msra.mxu0 %v901
        %v903 = vand.u32 %v612, 4294901760
        %v904 = vsub.f32 %v612, %v903
        %v905 = vand.u32 %v904, 4294901760
        %v906 = vsub.f32 %v904, %v905
        %v907 = vand.u32 %v906, 4294901760
        %908 = vmatprep.subr.mxu0 %v907
        %v909 = vand.u32 %v611, 4294901760
        %v910 = vsub.f32 %v611, %v909
        %v911 = vand.u32 %v910, 4294901760
        %v912 = vsub.f32 %v910, %v911
        %v913 = vand.u32 %v912, 4294901760
        %914 = vmatpush1.msra.mxu0 %v913
        %v915 = vand.u32 %v614, 4294901760
        %v916 = vsub.f32 %v614, %v915
        %v917 = vand.u32 %v916, 4294901760
        %v918 = vsub.f32 %v916, %v917
        %v919 = vand.u32 %v918, 4294901760
        %920 = vmatprep.subr.mxu0 %v919
        %v921 = vand.u32 %v613, 4294901760
        %v922 = vsub.f32 %v613, %v921
        %v923 = vand.u32 %v922, 4294901760
        %v924 = vsub.f32 %v922, %v923
        %v925 = vand.u32 %v924, 4294901760
        %926 = vmatpush1.msra.mxu0 %v925
        %v927 = vand.u32 %v616, 4294901760
        %v928 = vsub.f32 %v616, %v927
        %v929 = vand.u32 %v928, 4294901760
        %v930 = vsub.f32 %v928, %v929
        %v931 = vand.u32 %v930, 4294901760
        %932 = vmatprep.subr.mxu0 %v931
        %v933 = vand.u32 %v615, 4294901760
        %v934 = vsub.f32 %v615, %v933
        %v935 = vand.u32 %v934, 4294901760
        %v936 = vsub.f32 %v934, %v935
        %v937 = vand.u32 %v936, 4294901760
        %938 = vmatpush1.msra.mxu0 %v937
        %v939 = vand.u32 %v618, 4294901760
        %v940 = vsub.f32 %v618, %v939
        %v941 = vand.u32 %v940, 4294901760
        %v942 = vsub.f32 %v940, %v941
        %v943 = vand.u32 %v942, 4294901760
        %944 = vmatprep.subr.mxu0 %v943
        %v945 = vand.u32 %v617, 4294901760
        %v946 = vsub.f32 %v617, %v945
        %v947 = vand.u32 %v946, 4294901760
        %v948 = vsub.f32 %v946, %v947
        %v949 = vand.u32 %v948, 4294901760
        %950 = vmatpush1.msra.mxu0 %v949
        %v951 = vand.u32 %v620, 4294901760
        %v952 = vsub.f32 %v620, %v951
        %v953 = vand.u32 %v952, 4294901760
        %v954 = vsub.f32 %v952, %v953
        %v955 = vand.u32 %v954, 4294901760
        %956 = vmatprep.subr.mxu0 %v955
        %v957 = vand.u32 %v619, 4294901760
        %v958 = vsub.f32 %v619, %v957
        %v959 = vand.u32 %v958, 4294901760
        %v960 = vsub.f32 %v958, %v959
        %v961 = vand.u32 %v960, 4294901760
        %962 = vmatpush1.msra.mxu0 %v961
        %v963 = vand.u32 %v622, 4294901760
        %v964 = vsub.f32 %v622, %v963
        %v965 = vand.u32 %v964, 4294901760
        %v966 = vsub.f32 %v964, %v965
        %v967 = vand.u32 %v966, 4294901760
        %968 = vmatprep.subr.mxu0 %v967
        %v969 = vand.u32 %v621, 4294901760
        %v970 = vsub.f32 %v621, %v969
        %v971 = vand.u32 %v970, 4294901760
        %v972 = vsub.f32 %v970, %v971
        %v973 = vand.u32 %v972, 4294901760
        %974 = vmatpush1.msra.mxu0 %v973
        %v975 = vand.u32 %v624, 4294901760
        %v976 = vsub.f32 %v624, %v975
        %v977 = vand.u32 %v976, 4294901760
        %v978 = vsub.f32 %v976, %v977
        %v979 = vand.u32 %v978, 4294901760
        %980 = vmatprep.subr.mxu0 %v979
        %v981 = vand.u32 %v623, 4294901760
        %v982 = vsub.f32 %v623, %v981
        %v983 = vand.u32 %v982, 4294901760
        %v984 = vsub.f32 %v982, %v983
        %v985 = vand.u32 %v984, 4294901760
        %986 = vmatpush1.msra.mxu0 %v985
        %v987 = vand.u32 %v626, 4294901760
        %v988 = vsub.f32 %v626, %v987
        %v989 = vand.u32 %v988, 4294901760
        %v990 = vsub.f32 %v988, %v989
        %v991 = vand.u32 %v990, 4294901760
        %992 = vmatprep.subr.mxu0 %v991
        %v993 = vand.u32 %v625, 4294901760
        %v994 = vsub.f32 %v625, %v993
        %v995 = vand.u32 %v994, 4294901760
        %v996 = vsub.f32 %v994, %v995
        %v997 = vand.u32 %v996, 4294901760
        %998 = vmatpush1.msra.mxu0 %v997
        %v999 = vand.u32 %v628, 4294901760
        %v1000 = vsub.f32 %v628, %v999
        %v1001 = vand.u32 %v1000, 4294901760
        %v1002 = vsub.f32 %v1000, %v1001
        %v1003 = vand.u32 %v1002, 4294901760
        %1004 = vmatprep.subr.mxu0 %v1003
        %v1005 = vand.u32 %v627, 4294901760
        %v1006 = vsub.f32 %v627, %v1005
        %v1007 = vand.u32 %v1006, 4294901760
        %v1008 = vsub.f32 %v1006, %v1007
        %v1009 = vand.u32 %v1008, 4294901760
        %1010 = vmatpush1.msra.mxu0 %v1009
        %v1011 = vand.u32 %v630, 4294901760
        %v1012 = vsub.f32 %v630, %v1011
        %v1013 = vand.u32 %v1012, 4294901760
        %v1014 = vsub.f32 %v1012, %v1013
        %v1015 = vand.u32 %v1014, 4294901760
        %1016 = vmatprep.subr.mxu0 %v1015
        %v1017 = vand.u32 %v629, 4294901760
        %v1018 = vsub.f32 %v629, %v1017
        %v1019 = vand.u32 %v1018, 4294901760
        %v1020 = vsub.f32 %v1018, %v1019
        %v1021 = vand.u32 %v1020, 4294901760
        %1022 = vmatpush1.msra.mxu0 %v1021
        %v1023 = vand.u32 %v632, 4294901760
        %v1024 = vsub.f32 %v632, %v1023
        %v1025 = vand.u32 %v1024, 4294901760
        %v1026 = vsub.f32 %v1024, %v1025
        %v1027 = vand.u32 %v1026, 4294901760
        %1028 = vmatprep.subr.mxu0 %v1027
        %v1029 = vand.u32 %v631, 4294901760
        %v1030 = vsub.f32 %v631, %v1029
        %v1031 = vand.u32 %v1030, 4294901760
        %v1032 = vsub.f32 %v1030, %v1031
        %v1033 = vand.u32 %v1032, 4294901760
        %1034 = vmatpush1.msra.mxu0 %v1033
        %v1035 = vand.u32 %v634, 4294901760
        %v1036 = vsub.f32 %v634, %v1035
        %v1037 = vand.u32 %v1036, 4294901760
        %v1038 = vsub.f32 %v1036, %v1037
        %v1039 = vand.u32 %v1038, 4294901760
        %1040 = vmatprep.subr.mxu0 %v1039
        %v1041 = vand.u32 %v633, 4294901760
        %v1042 = vsub.f32 %v633, %v1041
        %v1043 = vand.u32 %v1042, 4294901760
        %v1044 = vsub.f32 %v1042, %v1043
        %v1045 = vand.u32 %v1044, 4294901760
        %1046 = vmatpush1.msra.mxu0 %v1045
        %v1047 = vand.u32 %v636, 4294901760
        %v1048 = vsub.f32 %v636, %v1047
        %v1049 = vand.u32 %v1048, 4294901760
        %v1050 = vsub.f32 %v1048, %v1049
        %v1051 = vand.u32 %v1050, 4294901760
        %1052 = vmatprep.subr.mxu0 %v1051
        %v1053 = vand.u32 %v635, 4294901760
        %v1054 = vsub.f32 %v635, %v1053
        %v1055 = vand.u32 %v1054, 4294901760
        %v1056 = vsub.f32 %v1054, %v1055
        %v1057 = vand.u32 %v1056, 4294901760
        %1058 = vmatpush1.msra.mxu0 %v1057
        %v1059 = vand.u32 %v638, 4294901760
        %v1060 = vsub.f32 %v638, %v1059
        %v1061 = vand.u32 %v1060, 4294901760
        %v1062 = vsub.f32 %v1060, %v1061
        %v1063 = vand.u32 %v1062, 4294901760
        %1064 = vmatprep.subr.mxu0 %v1063
        %v1065 = vand.u32 %v637, 4294901760
        %v1066 = vsub.f32 %v637, %v1065
        %v1067 = vand.u32 %v1066, 4294901760
        %v1068 = vsub.f32 %v1066, %v1067
        %v1069 = vand.u32 %v1068, 4294901760
        %1070 = vmatpush1.msra.mxu0 %v1069
        %v1071 = vand.u32 %v640, 4294901760
        %v1072 = vsub.f32 %v640, %v1071
        %v1073 = vand.u32 %v1072, 4294901760
        %v1074 = vsub.f32 %v1072, %v1073
        %v1075 = vand.u32 %v1074, 4294901760
        %1076 = vmatprep.subr.mxu0 %v1075
        %v1077 = vand.u32 %v639, 4294901760
        %v1078 = vsub.f32 %v639, %v1077
        %v1079 = vand.u32 %v1078, 4294901760
        %v1080 = vsub.f32 %v1078, %v1079
        %v1081 = vand.u32 %v1080, 4294901760
        %1082 = vmatpush1.msra.mxu0 %v1081
        %v1083 = vand.u32 %v642, 4294901760
        %v1084 = vsub.f32 %v642, %v1083
        %v1085 = vand.u32 %v1084, 4294901760
        %v1086 = vsub.f32 %v1084, %v1085
        %v1087 = vand.u32 %v1086, 4294901760
        %1088 = vmatprep.subr.mxu0 %v1087
        %v1089 = vand.u32 %v641, 4294901760
        %v1090 = vsub.f32 %v641, %v1089
        %v1091 = vand.u32 %v1090, 4294901760
        %v1092 = vsub.f32 %v1090, %v1091
        %v1093 = vand.u32 %v1092, 4294901760
        %1094 = vmatpush1.msra.mxu0 %v1093
        %v1095 = vand.u32 %v644, 4294901760
        %v1096 = vsub.f32 %v644, %v1095
        %v1097 = vand.u32 %v1096, 4294901760
        %v1098 = vsub.f32 %v1096, %v1097
        %v1099 = vand.u32 %v1098, 4294901760
        %1100 = vmatprep.subr.mxu0 %v1099
        %v1101 = vand.u32 %v643, 4294901760
        %v1102 = vsub.f32 %v643, %v1101
        %v1103 = vand.u32 %v1102, 4294901760
        %v1104 = vsub.f32 %v1102, %v1103
        %v1105 = vand.u32 %v1104, 4294901760
        %1106 = vmatpush1.msra.mxu0 %v1105
        %v1107 = vand.u32 %v646, 4294901760
        %v1108 = vsub.f32 %v646, %v1107
        %v1109 = vand.u32 %v1108, 4294901760
        %v1110 = vsub.f32 %v1108, %v1109
        %v1111 = vand.u32 %v1110, 4294901760
        %1112 = vmatprep.subr.mxu0 %v1111
        %v1113 = vand.u32 %v645, 4294901760
        %v1114 = vsub.f32 %v645, %v1113
        %v1115 = vand.u32 %v1114, 4294901760
        %v1116 = vsub.f32 %v1114, %v1115
        %v1117 = vand.u32 %v1116, 4294901760
        %1118 = vmatpush1.msra.mxu0 %v1117
        %v1119 = vand.u32 %v648, 4294901760
        %v1120 = vsub.f32 %v648, %v1119
        %v1121 = vand.u32 %v1120, 4294901760
        %v1122 = vsub.f32 %v1120, %v1121
        %v1123 = vand.u32 %v1122, 4294901760
        %1124 = vmatprep.subr.mxu0 %v1123
        %v1125 = vand.u32 %v647, 4294901760
        %v1126 = vsub.f32 %v647, %v1125
        %v1127 = vand.u32 %v1126, 4294901760
        %v1128 = vsub.f32 %v1126, %v1127
        %v1129 = vand.u32 %v1128, 4294901760
        %1130 = vmatpush1.msra.mxu0 %v1129
        %v1131 = vand.u32 %v650, 4294901760
        %v1132 = vsub.f32 %v650, %v1131
        %v1133 = vand.u32 %v1132, 4294901760
        %v1134 = vsub.f32 %v1132, %v1133
        %v1135 = vand.u32 %v1134, 4294901760
        %1136 = vmatprep.subr.mxu0 %v1135
        %v1137 = vand.u32 %v649, 4294901760
        %v1138 = vsub.f32 %v649, %v1137
        %v1139 = vand.u32 %v1138, 4294901760
        %v1140 = vsub.f32 %v1138, %v1139
        %v1141 = vand.u32 %v1140, 4294901760
        %1142 = vmatpush1.msra.mxu0 %v1141
        %v1143 = vand.u32 %v652, 4294901760
        %v1144 = vsub.f32 %v652, %v1143
        %v1145 = vand.u32 %v1144, 4294901760
        %v1146 = vsub.f32 %v1144, %v1145
        %v1147 = vand.u32 %v1146, 4294901760
        %1148 = vmatprep.subr.mxu0 %v1147
        %v1149 = vand.u32 %v651, 4294901760
        %v1150 = vsub.f32 %v651, %v1149
        %v1151 = vand.u32 %v1150, 4294901760
        %v1152 = vsub.f32 %v1150, %v1151
        %v1153 = vand.u32 %v1152, 4294901760
        %1154 = vmatpush1.msra.mxu0 %v1153
        %v1155 = vand.u32 %v654, 4294901760
        %v1156 = vsub.f32 %v654, %v1155
        %v1157 = vand.u32 %v1156, 4294901760
        %v1158 = vsub.f32 %v1156, %v1157
        %v1159 = vand.u32 %v1158, 4294901760
        %1160 = vmatprep.subr.mxu0 %v1159
        %v1161 = vand.u32 %v653, 4294901760
        %v1162 = vsub.f32 %v653, %v1161
        %v1163 = vand.u32 %v1162, 4294901760
        %v1164 = vsub.f32 %v1162, %v1163
        %v1165 = vand.u32 %v1164, 4294901760
        %1166 = vmatpush1.msra.mxu0 %v1165
        %v1167 = vand.u32 %v656, 4294901760
        %v1168 = vsub.f32 %v656, %v1167
        %v1169 = vand.u32 %v1168, 4294901760
        %v1170 = vsub.f32 %v1168, %v1169
        %v1171 = vand.u32 %v1170, 4294901760
        %1172 = vmatprep.subr.mxu0 %v1171
        %v1173 = vand.u32 %v655, 4294901760
        %v1174 = vsub.f32 %v655, %v1173
        %v1175 = vand.u32 %v1174, 4294901760
        %v1176 = vsub.f32 %v1174, %v1175
        %v1177 = vand.u32 %v1176, 4294901760
        %1178 = vmatpush1.msra.mxu0 %v1177
        %v1179 = vand.u32 %v658, 4294901760
        %v1180 = vsub.f32 %v658, %v1179
        %v1181 = vand.u32 %v1180, 4294901760
        %v1182 = vsub.f32 %v1180, %v1181
        %v1183 = vand.u32 %v1182, 4294901760
        %1184 = vmatprep.subr.mxu0 %v1183
        %v1185 = vand.u32 %v657, 4294901760
        %v1186 = vsub.f32 %v657, %v1185
        %v1187 = vand.u32 %v1186, 4294901760
        %v1188 = vsub.f32 %v1186, %v1187
        %v1189 = vand.u32 %v1188, 4294901760
        %1190 = vmatpush1.msra.mxu0 %v1189
        %v1191 = vand.u32 %v660, 4294901760
        %v1192 = vsub.f32 %v660, %v1191
        %v1193 = vand.u32 %v1192, 4294901760
        %v1194 = vsub.f32 %v1192, %v1193
        %v1195 = vand.u32 %v1194, 4294901760
        %1196 = vmatprep.subr.mxu0 %v1195
        %v1197 = vand.u32 %v659, 4294901760
        %v1198 = vsub.f32 %v659, %v1197
        %v1199 = vand.u32 %v1198, 4294901760
        %v1200 = vsub.f32 %v1198, %v1199
        %v1201 = vand.u32 %v1200, 4294901760
        %1202 = vmatpush1.msra.mxu0 %v1201
        %v1203 = vand.u32 %v671, 4294901760
        %1204 = vmatprep.mubr.f32.mxu0 %v1203
        %v1205 = vand.u32 %v670, 4294901760
        %1206 = vmatmul.mubr.f32.gmra.mrb[0].mxu0 %v1205
        %v1207 = vpop.f32.mrb[0].mxu0
        %v1208 = vadd.f32 %v815, %v1207
        %v1209 = vpop.f32.mrb[0].mxu0
        %v1210 = vadd.f32 %v817, %v1209
        %1211 = vdwg.mxu0
        %v1212 = vand.u32 %v598, 4294901760
        %v1213 = vsub.f32 %v598, %v1212
        %1214 = vmatprep.subr.mxu0 %v1213
        %v1215 = vand.u32 %v597, 4294901760
        %v1216 = vsub.f32 %v597, %v1215
        %1217 = vmatpush1.msra.mxu0 %v1216
        %v1218 = vand.u32 %v600, 4294901760
        %v1219 = vsub.f32 %v600, %v1218
        %1220 = vmatprep.subr.mxu0 %v1219
        %v1221 = vand.u32 %v599, 4294901760
        %v1222 = vsub.f32 %v599, %v1221
        %1223 = vmatpush1.msra.mxu0 %v1222
        %v1224 = vand.u32 %v602, 4294901760
        %v1225 = vsub.f32 %v602, %v1224
        %1226 = vmatprep.subr.mxu0 %v1225
        %v1227 = vand.u32 %v601, 4294901760
        %v1228 = vsub.f32 %v601, %v1227
        %1229 = vmatpush1.msra.mxu0 %v1228
        %v1230 = vand.u32 %v604, 4294901760
        %v1231 = vsub.f32 %v604, %v1230
        %1232 = vmatprep.subr.mxu0 %v1231
        %v1233 = vand.u32 %v603, 4294901760
        %v1234 = vsub.f32 %v603, %v1233
        %1235 = vmatpush1.msra.mxu0 %v1234
        %v1236 = vand.u32 %v606, 4294901760
        %v1237 = vsub.f32 %v606, %v1236
        %1238 = vmatprep.subr.mxu0 %v1237
        %v1239 = vand.u32 %v605, 4294901760
        %v1240 = vsub.f32 %v605, %v1239
        %1241 = vmatpush1.msra.mxu0 %v1240
        %v1242 = vand.u32 %v608, 4294901760
        %v1243 = vsub.f32 %v608, %v1242
        %1244 = vmatprep.subr.mxu0 %v1243
        %v1245 = vand.u32 %v607, 4294901760
        %v1246 = vsub.f32 %v607, %v1245
        %1247 = vmatpush1.msra.mxu0 %v1246
        %v1248 = vand.u32 %v610, 4294901760
        %v1249 = vsub.f32 %v610, %v1248
        %1250 = vmatprep.subr.mxu0 %v1249
        %v1251 = vand.u32 %v609, 4294901760
        %v1252 = vsub.f32 %v609, %v1251
        %1253 = vmatpush1.msra.mxu0 %v1252
        %v1254 = vand.u32 %v612, 4294901760
        %v1255 = vsub.f32 %v612, %v1254
        %1256 = vmatprep.subr.mxu0 %v1255
        %v1257 = vand.u32 %v611, 4294901760
        %v1258 = vsub.f32 %v611, %v1257
        %1259 = vmatpush1.msra.mxu0 %v1258
        %v1260 = vand.u32 %v614, 4294901760
        %v1261 = vsub.f32 %v614, %v1260
        %1262 = vmatprep.subr.mxu0 %v1261
        %v1263 = vand.u32 %v613, 4294901760
        %v1264 = vsub.f32 %v613, %v1263
        %1265 = vmatpush1.msra.mxu0 %v1264
        %v1266 = vand.u32 %v616, 4294901760
        %v1267 = vsub.f32 %v616, %v1266
        %1268 = vmatprep.subr.mxu0 %v1267
        %v1269 = vand.u32 %v615, 4294901760
        %v1270 = vsub.f32 %v615, %v1269
        %1271 = vmatpush1.msra.mxu0 %v1270
        %v1272 = vand.u32 %v618, 4294901760
        %v1273 = vsub.f32 %v618, %v1272
        %1274 = vmatprep.subr.mxu0 %v1273
        %v1275 = vand.u32 %v617, 4294901760
        %v1276 = vsub.f32 %v617, %v1275
        %1277 = vmatpush1.msra.mxu0 %v1276
        %v1278 = vand.u32 %v620, 4294901760
        %v1279 = vsub.f32 %v620, %v1278
        %1280 = vmatprep.subr.mxu0 %v1279
        %v1281 = vand.u32 %v619, 4294901760
        %v1282 = vsub.f32 %v619, %v1281
        %1283 = vmatpush1.msra.mxu0 %v1282
        %v1284 = vand.u32 %v622, 4294901760
        %v1285 = vsub.f32 %v622, %v1284
        %1286 = vmatprep.subr.mxu0 %v1285
        %v1287 = vand.u32 %v621, 4294901760
        %v1288 = vsub.f32 %v621, %v1287
        %1289 = vmatpush1.msra.mxu0 %v1288
        %v1290 = vand.u32 %v624, 4294901760
        %v1291 = vsub.f32 %v624, %v1290
        %1292 = vmatprep.subr.mxu0 %v1291
        %v1293 = vand.u32 %v623, 4294901760
        %v1294 = vsub.f32 %v623, %v1293
        %1295 = vmatpush1.msra.mxu0 %v1294
        %v1296 = vand.u32 %v626, 4294901760
        %v1297 = vsub.f32 %v626, %v1296
        %1298 = vmatprep.subr.mxu0 %v1297
        %v1299 = vand.u32 %v625, 4294901760
        %v1300 = vsub.f32 %v625, %v1299
        %1301 = vmatpush1.msra.mxu0 %v1300
        %v1302 = vand.u32 %v628, 4294901760
        %v1303 = vsub.f32 %v628, %v1302
        %1304 = vmatprep.subr.mxu0 %v1303
        %v1305 = vand.u32 %v627, 4294901760
        %v1306 = vsub.f32 %v627, %v1305
        %1307 = vmatpush1.msra.mxu0 %v1306
        %v1308 = vand.u32 %v630, 4294901760
        %v1309 = vsub.f32 %v630, %v1308
        %1310 = vmatprep.subr.mxu0 %v1309
        %v1311 = vand.u32 %v629, 4294901760
        %v1312 = vsub.f32 %v629, %v1311
        %1313 = vmatpush1.msra.mxu0 %v1312
        %v1314 = vand.u32 %v632, 4294901760
        %v1315 = vsub.f32 %v632, %v1314
        %1316 = vmatprep.subr.mxu0 %v1315
        %v1317 = vand.u32 %v631, 4294901760
        %v1318 = vsub.f32 %v631, %v1317
        %1319 = vmatpush1.msra.mxu0 %v1318
        %v1320 = vand.u32 %v634, 4294901760
        %v1321 = vsub.f32 %v634, %v1320
        %1322 = vmatprep.subr.mxu0 %v1321
        %v1323 = vand.u32 %v633, 4294901760
        %v1324 = vsub.f32 %v633, %v1323
        %1325 = vmatpush1.msra.mxu0 %v1324
        %v1326 = vand.u32 %v636, 4294901760
        %v1327 = vsub.f32 %v636, %v1326
        %1328 = vmatprep.subr.mxu0 %v1327
        %v1329 = vand.u32 %v635, 4294901760
        %v1330 = vsub.f32 %v635, %v1329
        %1331 = vmatpush1.msra.mxu0 %v1330
        %v1332 = vand.u32 %v638, 4294901760
        %v1333 = vsub.f32 %v638, %v1332
        %1334 = vmatprep.subr.mxu0 %v1333
        %v1335 = vand.u32 %v637, 4294901760
        %v1336 = vsub.f32 %v637, %v1335
        %1337 = vmatpush1.msra.mxu0 %v1336
        %v1338 = vand.u32 %v640, 4294901760
        %v1339 = vsub.f32 %v640, %v1338
        %1340 = vmatprep.subr.mxu0 %v1339
        %v1341 = vand.u32 %v639, 4294901760
        %v1342 = vsub.f32 %v639, %v1341
        %1343 = vmatpush1.msra.mxu0 %v1342
        %v1344 = vand.u32 %v642, 4294901760
        %v1345 = vsub.f32 %v642, %v1344
        %1346 = vmatprep.subr.mxu0 %v1345
        %v1347 = vand.u32 %v641, 4294901760
        %v1348 = vsub.f32 %v641, %v1347
        %1349 = vmatpush1.msra.mxu0 %v1348
        %v1350 = vand.u32 %v644, 4294901760
        %v1351 = vsub.f32 %v644, %v1350
        %1352 = vmatprep.subr.mxu0 %v1351
        %v1353 = vand.u32 %v643, 4294901760
        %v1354 = vsub.f32 %v643, %v1353
        %1355 = vmatpush1.msra.mxu0 %v1354
        %v1356 = vand.u32 %v646, 4294901760
        %v1357 = vsub.f32 %v646, %v1356
        %1358 = vmatprep.subr.mxu0 %v1357
        %v1359 = vand.u32 %v645, 4294901760
        %v1360 = vsub.f32 %v645, %v1359
        %1361 = vmatpush1.msra.mxu0 %v1360
        %v1362 = vand.u32 %v648, 4294901760
        %v1363 = vsub.f32 %v648, %v1362
        %1364 = vmatprep.subr.mxu0 %v1363
        %v1365 = vand.u32 %v647, 4294901760
        %v1366 = vsub.f32 %v647, %v1365
        %1367 = vmatpush1.msra.mxu0 %v1366
        %v1368 = vand.u32 %v650, 4294901760
        %v1369 = vsub.f32 %v650, %v1368
        %1370 = vmatprep.subr.mxu0 %v1369
        %v1371 = vand.u32 %v649, 4294901760
        %v1372 = vsub.f32 %v649, %v1371
        %1373 = vmatpush1.msra.mxu0 %v1372
        %v1374 = vand.u32 %v652, 4294901760
        %v1375 = vsub.f32 %v652, %v1374
        %1376 = vmatprep.subr.mxu0 %v1375
        %v1377 = vand.u32 %v651, 4294901760
        %v1378 = vsub.f32 %v651, %v1377
        %1379 = vmatpush1.msra.mxu0 %v1378
        %v1380 = vand.u32 %v654, 4294901760
        %v1381 = vsub.f32 %v654, %v1380
        %1382 = vmatprep.subr.mxu0 %v1381
        %v1383 = vand.u32 %v653, 4294901760
        %v1384 = vsub.f32 %v653, %v1383
        %1385 = vmatpush1.msra.mxu0 %v1384
        %v1386 = vand.u32 %v656, 4294901760
        %v1387 = vsub.f32 %v656, %v1386
        %1388 = vmatprep.subr.mxu0 %v1387
        %v1389 = vand.u32 %v655, 4294901760
        %v1390 = vsub.f32 %v655, %v1389
        %1391 = vmatpush1.msra.mxu0 %v1390
        %v1392 = vand.u32 %v658, 4294901760
        %v1393 = vsub.f32 %v658, %v1392
        %1394 = vmatprep.subr.mxu0 %v1393
        %v1395 = vand.u32 %v657, 4294901760
        %v1396 = vsub.f32 %v657, %v1395
        %1397 = vmatpush1.msra.mxu0 %v1396
        %v1398 = vand.u32 %v660, 4294901760
        %v1399 = vsub.f32 %v660, %v1398
        %1400 = vmatprep.subr.mxu0 %v1399
        %v1401 = vand.u32 %v659, 4294901760
        %v1402 = vsub.f32 %v659, %v1401
        %1403 = vmatpush1.msra.mxu0 %v1402
        %v1404 = vand.u32 %v671, 4294901760
        %v1405 = vsub.f32 %v671, %v1404
        %1406 = vmatprep.mubr.f32.mxu0 %v1405
        %v1407 = vand.u32 %v670, 4294901760
        %v1408 = vsub.f32 %v670, %v1407
        %1409 = vmatmul.mubr.f32.gmra.mrb[0].mxu0 %v1408
        %v1410 = vpop.f32.mrb[0].mxu0
        %v1411 = vadd.f32 %v1208, %v1410
        %v1412 = vpop.f32.mrb[0].mxu0
        %v1413 = vadd.f32 %v1210, %v1412
        %1414 = vdwg.mxu0
        %v1415 = vand.u32 %v598, 4294901760
        %1416 = vmatprep.subr.mxu0 %v1415
        %v1417 = vand.u32 %v597, 4294901760
        %1418 = vmatpush1.msra.mxu0 %v1417
        %v1419 = vand.u32 %v600, 4294901760
        %1420 = vmatprep.subr.mxu0 %v1419
        %v1421 = vand.u32 %v599, 4294901760
        %1422 = vmatpush1.msra.mxu0 %v1421
        %v1423 = vand.u32 %v602, 4294901760
        %1424 = vmatprep.subr.mxu0 %v1423
        %v1425 = vand.u32 %v601, 4294901760
        %1426 = vmatpush1.msra.mxu0 %v1425
        %v1427 = vand.u32 %v604, 4294901760
        %1428 = vmatprep.subr.mxu0 %v1427
        %v1429 = vand.u32 %v603, 4294901760
        %1430 = vmatpush1.msra.mxu0 %v1429
        %v1431 = vand.u32 %v606, 4294901760
        %1432 = vmatprep.subr.mxu0 %v1431
        %v1433 = vand.u32 %v605, 4294901760
        %1434 = vmatpush1.msra.mxu0 %v1433
        %v1435 = vand.u32 %v608, 4294901760
        %1436 = vmatprep.subr.mxu0 %v1435
        %v1437 = vand.u32 %v607, 4294901760
        %1438 = vmatpush1.msra.mxu0 %v1437
        %v1439 = vand.u32 %v610, 4294901760
        %1440 = vmatprep.subr.mxu0 %v1439
        %v1441 = vand.u32 %v609, 4294901760
        %1442 = vmatpush1.msra.mxu0 %v1441
        %v1443 = vand.u32 %v612, 4294901760
        %1444 = vmatprep.subr.mxu0 %v1443
        %v1445 = vand.u32 %v611, 4294901760
        %1446 = vmatpush1.msra.mxu0 %v1445
        %v1447 = vand.u32 %v614, 4294901760
        %1448 = vmatprep.subr.mxu0 %v1447
        %v1449 = vand.u32 %v613, 4294901760
        %1450 = vmatpush1.msra.mxu0 %v1449
        %v1451 = vand.u32 %v616, 4294901760
        %1452 = vmatprep.subr.mxu0 %v1451
        %v1453 = vand.u32 %v615, 4294901760
        %1454 = vmatpush1.msra.mxu0 %v1453
        %v1455 = vand.u32 %v618, 4294901760
        %1456 = vmatprep.subr.mxu0 %v1455
        %v1457 = vand.u32 %v617, 4294901760
        %1458 = vmatpush1.msra.mxu0 %v1457
        %v1459 = vand.u32 %v620, 4294901760
        %1460 = vmatprep.subr.mxu0 %v1459
        %v1461 = vand.u32 %v619, 4294901760
        %1462 = vmatpush1.msra.mxu0 %v1461
        %v1463 = vand.u32 %v622, 4294901760
        %1464 = vmatprep.subr.mxu0 %v1463
        %v1465 = vand.u32 %v621, 4294901760
        %1466 = vmatpush1.msra.mxu0 %v1465
        %v1467 = vand.u32 %v624, 4294901760
        %1468 = vmatprep.subr.mxu0 %v1467
        %v1469 = vand.u32 %v623, 4294901760
        %1470 = vmatpush1.msra.mxu0 %v1469
        %v1471 = vand.u32 %v626, 4294901760
        %1472 = vmatprep.subr.mxu0 %v1471
        %v1473 = vand.u32 %v625, 4294901760
        %1474 = vmatpush1.msra.mxu0 %v1473
        %v1475 = vand.u32 %v628, 4294901760
        %1476 = vmatprep.subr.mxu0 %v1475
        %v1477 = vand.u32 %v627, 4294901760
        %1478 = vmatpush1.msra.mxu0 %v1477
        %v1479 = vand.u32 %v630, 4294901760
        %1480 = vmatprep.subr.mxu0 %v1479
        %v1481 = vand.u32 %v629, 4294901760
        %1482 = vmatpush1.msra.mxu0 %v1481
        %v1483 = vand.u32 %v632, 4294901760
        %1484 = vmatprep.subr.mxu0 %v1483
        %v1485 = vand.u32 %v631, 4294901760
        %1486 = vmatpush1.msra.mxu0 %v1485
        %v1487 = vand.u32 %v634, 4294901760
        %1488 = vmatprep.subr.mxu0 %v1487
        %v1489 = vand.u32 %v633, 4294901760
        %1490 = vmatpush1.msra.mxu0 %v1489
        %v1491 = vand.u32 %v636, 4294901760
        %1492 = vmatprep.subr.mxu0 %v1491
        %v1493 = vand.u32 %v635, 4294901760
        %1494 = vmatpush1.msra.mxu0 %v1493
        %v1495 = vand.u32 %v638, 4294901760
        %1496 = vmatprep.subr.mxu0 %v1495
        %v1497 = vand.u32 %v637, 4294901760
        %1498 = vmatpush1.msra.mxu0 %v1497
        %v1499 = vand.u32 %v640, 4294901760
        %1500 = vmatprep.subr.mxu0 %v1499
        %v1501 = vand.u32 %v639, 4294901760
        %1502 = vmatpush1.msra.mxu0 %v1501
        %v1503 = vand.u32 %v642, 4294901760
        %1504 = vmatprep.subr.mxu0 %v1503
        %v1505 = vand.u32 %v641, 4294901760
        %1506 = vmatpush1.msra.mxu0 %v1505
        %v1507 = vand.u32 %v644, 4294901760
        %1508 = vmatprep.subr.mxu0 %v1507
        %v1509 = vand.u32 %v643, 4294901760
        %1510 = vmatpush1.msra.mxu0 %v1509
        %v1511 = vand.u32 %v646, 4294901760
        %1512 = vmatprep.subr.mxu0 %v1511
        %v1513 = vand.u32 %v645, 4294901760
        %1514 = vmatpush1.msra.mxu0 %v1513
        %v1515 = vand.u32 %v648, 4294901760
        %1516 = vmatprep.subr.mxu0 %v1515
        %v1517 = vand.u32 %v647, 4294901760
        %1518 = vmatpush1.msra.mxu0 %v1517
        %v1519 = vand.u32 %v650, 4294901760
        %1520 = vmatprep.subr.mxu0 %v1519
        %v1521 = vand.u32 %v649, 4294901760
        %1522 = vmatpush1.msra.mxu0 %v1521
        %v1523 = vand.u32 %v652, 4294901760
        %1524 = vmatprep.subr.mxu0 %v1523
        %v1525 = vand.u32 %v651, 4294901760
        %1526 = vmatpush1.msra.mxu0 %v1525
        %v1527 = vand.u32 %v654, 4294901760
        %1528 = vmatprep.subr.mxu0 %v1527
        %v1529 = vand.u32 %v653, 4294901760
        %1530 = vmatpush1.msra.mxu0 %v1529
        %v1531 = vand.u32 %v656, 4294901760
        %1532 = vmatprep.subr.mxu0 %v1531
        %v1533 = vand.u32 %v655, 4294901760
        %1534 = vmatpush1.msra.mxu0 %v1533
        %v1535 = vand.u32 %v658, 4294901760
        %1536 = vmatprep.subr.mxu0 %v1535
        %v1537 = vand.u32 %v657, 4294901760
        %1538 = vmatpush1.msra.mxu0 %v1537
        %v1539 = vand.u32 %v660, 4294901760
        %1540 = vmatprep.subr.mxu0 %v1539
        %v1541 = vand.u32 %v659, 4294901760
        %1542 = vmatpush1.msra.mxu0 %v1541
        %v1543 = vand.u32 %v671, 4294901760
        %v1544 = vsub.f32 %v671, %v1543
        %v1545 = vand.u32 %v1544, 4294901760
        %1546 = vmatprep.mubr.f32.mxu0 %v1545
        %v1547 = vand.u32 %v670, 4294901760
        %v1548 = vsub.f32 %v670, %v1547
        %v1549 = vand.u32 %v1548, 4294901760
        %1550 = vmatmul.mubr.f32.gmra.mrb[0].mxu0 %v1549
        %v1551 = vpop.f32.mrb[0].mxu0
        %v1552 = vadd.f32 %v1411, %v1551
        %v1553 = vpop.f32.mrb[0].mxu0
        %v1554 = vadd.f32 %v1413, %v1553
        %1555 = vdwg.mxu0
        %v1556 = vand.u32 %v598, 4294901760
        %v1557 = vsub.f32 %v598, %v1556
        %v1558 = vand.u32 %v1557, 4294901760
        %1559 = vmatprep.subr.mxu0 %v1558
        %v1560 = vand.u32 %v597, 4294901760
        %v1561 = vsub.f32 %v597, %v1560
        %v1562 = vand.u32 %v1561, 4294901760
        %1563 = vmatpush1.msra.mxu0 %v1562
        %v1564 = vand.u32 %v600, 4294901760
        %v1565 = vsub.f32 %v600, %v1564
        %v1566 = vand.u32 %v1565, 4294901760
        %1567 = vmatprep.subr.mxu0 %v1566
        %v1568 = vand.u32 %v599, 4294901760
        %v1569 = vsub.f32 %v599, %v1568
        %v1570 = vand.u32 %v1569, 4294901760
        %1571 = vmatpush1.msra.mxu0 %v1570
        %v1572 = vand.u32 %v602, 4294901760
        %v1573 = vsub.f32 %v602, %v1572
        %v1574 = vand.u32 %v1573, 4294901760
        %1575 = vmatprep.subr.mxu0 %v1574
        %v1576 = vand.u32 %v601, 4294901760
        %v1577 = vsub.f32 %v601, %v1576
        %v1578 = vand.u32 %v1577, 4294901760
        %1579 = vmatpush1.msra.mxu0 %v1578
        %v1580 = vand.u32 %v604, 4294901760
        %v1581 = vsub.f32 %v604, %v1580
        %v1582 = vand.u32 %v1581, 4294901760
        %1583 = vmatprep.subr.mxu0 %v1582
        %v1584 = vand.u32 %v603, 4294901760
        %v1585 = vsub.f32 %v603, %v1584
        %v1586 = vand.u32 %v1585, 4294901760
        %1587 = vmatpush1.msra.mxu0 %v1586
        %v1588 = vand.u32 %v606, 4294901760
        %v1589 = vsub.f32 %v606, %v1588
        %v1590 = vand.u32 %v1589, 4294901760
        %1591 = vmatprep.subr.mxu0 %v1590
        %v1592 = vand.u32 %v605, 4294901760
        %v1593 = vsub.f32 %v605, %v1592
        %v1594 = vand.u32 %v1593, 4294901760
        %1595 = vmatpush1.msra.mxu0 %v1594
        %v1596 = vand.u32 %v608, 4294901760
        %v1597 = vsub.f32 %v608, %v1596
        %v1598 = vand.u32 %v1597, 4294901760
        %1599 = vmatprep.subr.mxu0 %v1598
        %v1600 = vand.u32 %v607, 4294901760
        %v1601 = vsub.f32 %v607, %v1600
        %v1602 = vand.u32 %v1601, 4294901760
        %1603 = vmatpush1.msra.mxu0 %v1602
        %v1604 = vand.u32 %v610, 4294901760
        %v1605 = vsub.f32 %v610, %v1604
        %v1606 = vand.u32 %v1605, 4294901760
        %1607 = vmatprep.subr.mxu0 %v1606
        %v1608 = vand.u32 %v609, 4294901760
        %v1609 = vsub.f32 %v609, %v1608
        %v1610 = vand.u32 %v1609, 4294901760
        %1611 = vmatpush1.msra.mxu0 %v1610
        %v1612 = vand.u32 %v612, 4294901760
        %v1613 = vsub.f32 %v612, %v1612
        %v1614 = vand.u32 %v1613, 4294901760
        %1615 = vmatprep.subr.mxu0 %v1614
        %v1616 = vand.u32 %v611, 4294901760
        %v1617 = vsub.f32 %v611, %v1616
        %v1618 = vand.u32 %v1617, 4294901760
        %1619 = vmatpush1.msra.mxu0 %v1618
        %v1620 = vand.u32 %v614, 4294901760
        %v1621 = vsub.f32 %v614, %v1620
        %v1622 = vand.u32 %v1621, 4294901760
        %1623 = vmatprep.subr.mxu0 %v1622
        %v1624 = vand.u32 %v613, 4294901760
        %v1625 = vsub.f32 %v613, %v1624
        %v1626 = vand.u32 %v1625, 4294901760
        %1627 = vmatpush1.msra.mxu0 %v1626
        %v1628 = vand.u32 %v616, 4294901760
        %v1629 = vsub.f32 %v616, %v1628
        %v1630 = vand.u32 %v1629, 4294901760
        %1631 = vmatprep.subr.mxu0 %v1630
        %v1632 = vand.u32 %v615, 4294901760
        %v1633 = vsub.f32 %v615, %v1632
        %v1634 = vand.u32 %v1633, 4294901760
        %1635 = vmatpush1.msra.mxu0 %v1634
        %v1636 = vand.u32 %v618, 4294901760
        %v1637 = vsub.f32 %v618, %v1636
        %v1638 = vand.u32 %v1637, 4294901760
        %1639 = vmatprep.subr.mxu0 %v1638
        %v1640 = vand.u32 %v617, 4294901760
        %v1641 = vsub.f32 %v617, %v1640
        %v1642 = vand.u32 %v1641, 4294901760
        %1643 = vmatpush1.msra.mxu0 %v1642
        %v1644 = vand.u32 %v620, 4294901760
        %v1645 = vsub.f32 %v620, %v1644
        %v1646 = vand.u32 %v1645, 4294901760
        %1647 = vmatprep.subr.mxu0 %v1646
        %v1648 = vand.u32 %v619, 4294901760
        %v1649 = vsub.f32 %v619, %v1648
        %v1650 = vand.u32 %v1649, 4294901760
        %1651 = vmatpush1.msra.mxu0 %v1650
        %v1652 = vand.u32 %v622, 4294901760
        %v1653 = vsub.f32 %v622, %v1652
        %v1654 = vand.u32 %v1653, 4294901760
        %1655 = vmatprep.subr.mxu0 %v1654
        %v1656 = vand.u32 %v621, 4294901760
        %v1657 = vsub.f32 %v621, %v1656
        %v1658 = vand.u32 %v1657, 4294901760
        %1659 = vmatpush1.msra.mxu0 %v1658
        %v1660 = vand.u32 %v624, 4294901760
        %v1661 = vsub.f32 %v624, %v1660
        %v1662 = vand.u32 %v1661, 4294901760
        %1663 = vmatprep.subr.mxu0 %v1662
        %v1664 = vand.u32 %v623, 4294901760
        %v1665 = vsub.f32 %v623, %v1664
        %v1666 = vand.u32 %v1665, 4294901760
        %1667 = vmatpush1.msra.mxu0 %v1666
        %v1668 = vand.u32 %v626, 4294901760
        %v1669 = vsub.f32 %v626, %v1668
        %v1670 = vand.u32 %v1669, 4294901760
        %1671 = vmatprep.subr.mxu0 %v1670
        %v1672 = vand.u32 %v625, 4294901760
        %v1673 = vsub.f32 %v625, %v1672
        %v1674 = vand.u32 %v1673, 4294901760
        %1675 = vmatpush1.msra.mxu0 %v1674
        %v1676 = vand.u32 %v628, 4294901760
        %v1677 = vsub.f32 %v628, %v1676
        %v1678 = vand.u32 %v1677, 4294901760
        %1679 = vmatprep.subr.mxu0 %v1678
        %v1680 = vand.u32 %v627, 4294901760
        %v1681 = vsub.f32 %v627, %v1680
        %v1682 = vand.u32 %v1681, 4294901760
        %1683 = vmatpush1.msra.mxu0 %v1682
        %v1684 = vand.u32 %v630, 4294901760
        %v1685 = vsub.f32 %v630, %v1684
        %v1686 = vand.u32 %v1685, 4294901760
        %1687 = vmatprep.subr.mxu0 %v1686
        %v1688 = vand.u32 %v629, 4294901760
        %v1689 = vsub.f32 %v629, %v1688
        %v1690 = vand.u32 %v1689, 4294901760
        %1691 = vmatpush1.msra.mxu0 %v1690
        %v1692 = vand.u32 %v632, 4294901760
        %v1693 = vsub.f32 %v632, %v1692
        %v1694 = vand.u32 %v1693, 4294901760
        %1695 = vmatprep.subr.mxu0 %v1694
        %v1696 = vand.u32 %v631, 4294901760
        %v1697 = vsub.f32 %v631, %v1696
        %v1698 = vand.u32 %v1697, 4294901760
        %1699 = vmatpush1.msra.mxu0 %v1698
        %v1700 = vand.u32 %v634, 4294901760
        %v1701 = vsub.f32 %v634, %v1700
        %v1702 = vand.u32 %v1701, 4294901760
        %1703 = vmatprep.subr.mxu0 %v1702
        %v1704 = vand.u32 %v633, 4294901760
        %v1705 = vsub.f32 %v633, %v1704
        %v1706 = vand.u32 %v1705, 4294901760
        %1707 = vmatpush1.msra.mxu0 %v1706
        %v1708 = vand.u32 %v636, 4294901760
        %v1709 = vsub.f32 %v636, %v1708
        %v1710 = vand.u32 %v1709, 4294901760
        %1711 = vmatprep.subr.mxu0 %v1710
        %v1712 = vand.u32 %v635, 4294901760
        %v1713 = vsub.f32 %v635, %v1712
        %v1714 = vand.u32 %v1713, 4294901760
        %1715 = vmatpush1.msra.mxu0 %v1714
        %v1716 = vand.u32 %v638, 4294901760
        %v1717 = vsub.f32 %v638, %v1716
        %v1718 = vand.u32 %v1717, 4294901760
        %1719 = vmatprep.subr.mxu0 %v1718
        %v1720 = vand.u32 %v637, 4294901760
        %v1721 = vsub.f32 %v637, %v1720
        %v1722 = vand.u32 %v1721, 4294901760
        %1723 = vmatpush1.msra.mxu0 %v1722
        %v1724 = vand.u32 %v640, 4294901760
        %v1725 = vsub.f32 %v640, %v1724
        %v1726 = vand.u32 %v1725, 4294901760
        %1727 = vmatprep.subr.mxu0 %v1726
        %v1728 = vand.u32 %v639, 4294901760
        %v1729 = vsub.f32 %v639, %v1728
        %v1730 = vand.u32 %v1729, 4294901760
        %1731 = vmatpush1.msra.mxu0 %v1730
        %v1732 = vand.u32 %v642, 4294901760
        %v1733 = vsub.f32 %v642, %v1732
        %v1734 = vand.u32 %v1733, 4294901760
        %1735 = vmatprep.subr.mxu0 %v1734
        %v1736 = vand.u32 %v641, 4294901760
        %v1737 = vsub.f32 %v641, %v1736
        %v1738 = vand.u32 %v1737, 4294901760
        %1739 = vmatpush1.msra.mxu0 %v1738
        %v1740 = vand.u32 %v644, 4294901760
        %v1741 = vsub.f32 %v644, %v1740
        %v1742 = vand.u32 %v1741, 4294901760
        %1743 = vmatprep.subr.mxu0 %v1742
        %v1744 = vand.u32 %v643, 4294901760
        %v1745 = vsub.f32 %v643, %v1744
        %v1746 = vand.u32 %v1745, 4294901760
        %1747 = vmatpush1.msra.mxu0 %v1746
        %v1748 = vand.u32 %v646, 4294901760
        %v1749 = vsub.f32 %v646, %v1748
        %v1750 = vand.u32 %v1749, 4294901760
        %1751 = vmatprep.subr.mxu0 %v1750
        %v1752 = vand.u32 %v645, 4294901760
        %v1753 = vsub.f32 %v645, %v1752
        %v1754 = vand.u32 %v1753, 4294901760
        %1755 = vmatpush1.msra.mxu0 %v1754
        %v1756 = vand.u32 %v648, 4294901760
        %v1757 = vsub.f32 %v648, %v1756
        %v1758 = vand.u32 %v1757, 4294901760
        %1759 = vmatprep.subr.mxu0 %v1758
        %v1760 = vand.u32 %v647, 4294901760
        %v1761 = vsub.f32 %v647, %v1760
        %v1762 = vand.u32 %v1761, 4294901760
        %1763 = vmatpush1.msra.mxu0 %v1762
        %v1764 = vand.u32 %v650, 4294901760
        %v1765 = vsub.f32 %v650, %v1764
        %v1766 = vand.u32 %v1765, 4294901760
        %1767 = vmatprep.subr.mxu0 %v1766
        %v1768 = vand.u32 %v649, 4294901760
        %v1769 = vsub.f32 %v649, %v1768
        %v1770 = vand.u32 %v1769, 4294901760
        %1771 = vmatpush1.msra.mxu0 %v1770
        %v1772 = vand.u32 %v652, 4294901760
        %v1773 = vsub.f32 %v652, %v1772
        %v1774 = vand.u32 %v1773, 4294901760
        %1775 = vmatprep.subr.mxu0 %v1774
        %v1776 = vand.u32 %v651, 4294901760
        %v1777 = vsub.f32 %v651, %v1776
        %v1778 = vand.u32 %v1777, 4294901760
        %1779 = vmatpush1.msra.mxu0 %v1778
        %v1780 = vand.u32 %v654, 4294901760
        %v1781 = vsub.f32 %v654, %v1780
        %v1782 = vand.u32 %v1781, 4294901760
        %1783 = vmatprep.subr.mxu0 %v1782
        %v1784 = vand.u32 %v653, 4294901760
        %v1785 = vsub.f32 %v653, %v1784
        %v1786 = vand.u32 %v1785, 4294901760
        %1787 = vmatpush1.msra.mxu0 %v1786
        %v1788 = vand.u32 %v656, 4294901760
        %v1789 = vsub.f32 %v656, %v1788
        %v1790 = vand.u32 %v1789, 4294901760
        %1791 = vmatprep.subr.mxu0 %v1790
        %v1792 = vand.u32 %v655, 4294901760
        %v1793 = vsub.f32 %v655, %v1792
        %v1794 = vand.u32 %v1793, 4294901760
        %1795 = vmatpush1.msra.mxu0 %v1794
        %v1796 = vand.u32 %v658, 4294901760
        %v1797 = vsub.f32 %v658, %v1796
        %v1798 = vand.u32 %v1797, 4294901760
        %1799 = vmatprep.subr.mxu0 %v1798
        %v1800 = vand.u32 %v657, 4294901760
        %v1801 = vsub.f32 %v657, %v1800
        %v1802 = vand.u32 %v1801, 4294901760
        %1803 = vmatpush1.msra.mxu0 %v1802
        %v1804 = vand.u32 %v660, 4294901760
        %v1805 = vsub.f32 %v660, %v1804
        %v1806 = vand.u32 %v1805, 4294901760
        %1807 = vmatprep.subr.mxu0 %v1806
        %v1808 = vand.u32 %v659, 4294901760
        %v1809 = vsub.f32 %v659, %v1808
        %v1810 = vand.u32 %v1809, 4294901760
        %1811 = vmatpush1.msra.mxu0 %v1810
        %v1812 = vand.u32 %v671, 4294901760
        %1813 = vmatprep.mubr.f32.mxu0 %v1812
        %v1814 = vand.u32 %v670, 4294901760
        %1815 = vmatmul.mubr.f32.gmra.mrb[0].mxu0 %v1814
        %v1816 = vpop.f32.mrb[0].mxu0
        %v1817 = vadd.f32 %v1552, %v1816
        %v1818 = vpop.f32.mrb[0].mxu0
        %v1819 = vadd.f32 %v1554, %v1818
        %1820 = vdwg.mxu0
        %v1821 = vand.u32 %v598, 4294901760
        %1822 = vmatprep.subr.mxu0 %v1821
        %v1823 = vand.u32 %v597, 4294901760
        %1824 = vmatpush1.msra.mxu0 %v1823
        %v1825 = vand.u32 %v600, 4294901760
        %1826 = vmatprep.subr.mxu0 %v1825
        %v1827 = vand.u32 %v599, 4294901760
        %1828 = vmatpush1.msra.mxu0 %v1827
        %v1829 = vand.u32 %v602, 4294901760
        %1830 = vmatprep.subr.mxu0 %v1829
        %v1831 = vand.u32 %v601, 4294901760
        %1832 = vmatpush1.msra.mxu0 %v1831
        %v1833 = vand.u32 %v604, 4294901760
        %1834 = vmatprep.subr.mxu0 %v1833
        %v1835 = vand.u32 %v603, 4294901760
        %1836 = vmatpush1.msra.mxu0 %v1835
        %v1837 = vand.u32 %v606, 4294901760
        %1838 = vmatprep.subr.mxu0 %v1837
        %v1839 = vand.u32 %v605, 4294901760
        %1840 = vmatpush1.msra.mxu0 %v1839
        %v1841 = vand.u32 %v608, 4294901760
        %1842 = vmatprep.subr.mxu0 %v1841
        %v1843 = vand.u32 %v607, 4294901760
        %1844 = vmatpush1.msra.mxu0 %v1843
        %v1845 = vand.u32 %v610, 4294901760
        %1846 = vmatprep.subr.mxu0 %v1845
        %v1847 = vand.u32 %v609, 4294901760
        %1848 = vmatpush1.msra.mxu0 %v1847
        %v1849 = vand.u32 %v612, 4294901760
        %1850 = vmatprep.subr.mxu0 %v1849
        %v1851 = vand.u32 %v611, 4294901760
        %1852 = vmatpush1.msra.mxu0 %v1851
        %v1853 = vand.u32 %v614, 4294901760
        %1854 = vmatprep.subr.mxu0 %v1853
        %v1855 = vand.u32 %v613, 4294901760
        %1856 = vmatpush1.msra.mxu0 %v1855
        %v1857 = vand.u32 %v616, 4294901760
        %1858 = vmatprep.subr.mxu0 %v1857
        %v1859 = vand.u32 %v615, 4294901760
        %1860 = vmatpush1.msra.mxu0 %v1859
        %v1861 = vand.u32 %v618, 4294901760
        %1862 = vmatprep.subr.mxu0 %v1861
        %v1863 = vand.u32 %v617, 4294901760
        %1864 = vmatpush1.msra.mxu0 %v1863
        %v1865 = vand.u32 %v620, 4294901760
        %1866 = vmatprep.subr.mxu0 %v1865
        %v1867 = vand.u32 %v619, 4294901760
        %1868 = vmatpush1.msra.mxu0 %v1867
        %v1869 = vand.u32 %v622, 4294901760
        %1870 = vmatprep.subr.mxu0 %v1869
        %v1871 = vand.u32 %v621, 4294901760
        %1872 = vmatpush1.msra.mxu0 %v1871
        %v1873 = vand.u32 %v624, 4294901760
        %1874 = vmatprep.subr.mxu0 %v1873
        %v1875 = vand.u32 %v623, 4294901760
        %1876 = vmatpush1.msra.mxu0 %v1875
        %v1877 = vand.u32 %v626, 4294901760
        %1878 = vmatprep.subr.mxu0 %v1877
        %v1879 = vand.u32 %v625, 4294901760
        %1880 = vmatpush1.msra.mxu0 %v1879
        %v1881 = vand.u32 %v628, 4294901760
        %1882 = vmatprep.subr.mxu0 %v1881
        %v1883 = vand.u32 %v627, 4294901760
        %1884 = vmatpush1.msra.mxu0 %v1883
        %v1885 = vand.u32 %v630, 4294901760
        %1886 = vmatprep.subr.mxu0 %v1885
        %v1887 = vand.u32 %v629, 4294901760
        %1888 = vmatpush1.msra.mxu0 %v1887
        %v1889 = vand.u32 %v632, 4294901760
        %1890 = vmatprep.subr.mxu0 %v1889
        %v1891 = vand.u32 %v631, 4294901760
        %1892 = vmatpush1.msra.mxu0 %v1891
        %v1893 = vand.u32 %v634, 4294901760
        %1894 = vmatprep.subr.mxu0 %v1893
        %v1895 = vand.u32 %v633, 4294901760
        %1896 = vmatpush1.msra.mxu0 %v1895
        %v1897 = vand.u32 %v636, 4294901760
        %1898 = vmatprep.subr.mxu0 %v1897
        %v1899 = vand.u32 %v635, 4294901760
        %1900 = vmatpush1.msra.mxu0 %v1899
        %v1901 = vand.u32 %v638, 4294901760
        %1902 = vmatprep.subr.mxu0 %v1901
        %v1903 = vand.u32 %v637, 4294901760
        %1904 = vmatpush1.msra.mxu0 %v1903
        %v1905 = vand.u32 %v640, 4294901760
        %1906 = vmatprep.subr.mxu0 %v1905
        %v1907 = vand.u32 %v639, 4294901760
        %1908 = vmatpush1.msra.mxu0 %v1907
        %v1909 = vand.u32 %v642, 4294901760
        %1910 = vmatprep.subr.mxu0 %v1909
        %v1911 = vand.u32 %v641, 4294901760
        %1912 = vmatpush1.msra.mxu0 %v1911
        %v1913 = vand.u32 %v644, 4294901760
        %1914 = vmatprep.subr.mxu0 %v1913
        %v1915 = vand.u32 %v643, 4294901760
        %1916 = vmatpush1.msra.mxu0 %v1915
        %v1917 = vand.u32 %v646, 4294901760
        %1918 = vmatprep.subr.mxu0 %v1917
        %v1919 = vand.u32 %v645, 4294901760
        %1920 = vmatpush1.msra.mxu0 %v1919
        %v1921 = vand.u32 %v648, 4294901760
        %1922 = vmatprep.subr.mxu0 %v1921
        %v1923 = vand.u32 %v647, 4294901760
        %1924 = vmatpush1.msra.mxu0 %v1923
        %v1925 = vand.u32 %v650, 4294901760
        %1926 = vmatprep.subr.mxu0 %v1925
        %v1927 = vand.u32 %v649, 4294901760
        %1928 = vmatpush1.msra.mxu0 %v1927
        %v1929 = vand.u32 %v652, 4294901760
        %1930 = vmatprep.subr.mxu0 %v1929
        %v1931 = vand.u32 %v651, 4294901760
        %1932 = vmatpush1.msra.mxu0 %v1931
        %v1933 = vand.u32 %v654, 4294901760
        %1934 = vmatprep.subr.mxu0 %v1933
        %v1935 = vand.u32 %v653, 4294901760
        %1936 = vmatpush1.msra.mxu0 %v1935
        %v1937 = vand.u32 %v656, 4294901760
        %1938 = vmatprep.subr.mxu0 %v1937
        %v1939 = vand.u32 %v655, 4294901760
        %1940 = vmatpush1.msra.mxu0 %v1939
        %v1941 = vand.u32 %v658, 4294901760
        %1942 = vmatprep.subr.mxu0 %v1941
        %v1943 = vand.u32 %v657, 4294901760
        %1944 = vmatpush1.msra.mxu0 %v1943
        %v1945 = vand.u32 %v660, 4294901760
        %1946 = vmatprep.subr.mxu0 %v1945
        %v1947 = vand.u32 %v659, 4294901760
        %1948 = vmatpush1.msra.mxu0 %v1947
        %v1949 = vand.u32 %v671, 4294901760
        %1950 = vmatprep.mubr.f32.mxu0 %v1949
        %v1951 = vand.u32 %v670, 4294901760
        %1952 = vmatmul.mubr.f32.gmra.mrb[0].mxu0 %v1951
        %v1953 = vpop.f32.mrb[0].mxu0
        %v1954 = vadd.f32 %v1817, %v1953
        %v1955 = vpop.f32.mrb[0].mxu0
        %v1956 = vadd.f32 %v1819, %v1955
        %1957 = vdwg.mxu0
        %v1960 = vcombine.low %v1954, %v1956
        %v1962 = vunpack.c.l.s4 1983009808
        %v1963 = vunpack.c.0.s8 %v1962
        %v1964 = vlaneseq
        %v1965 = vshrl.u32 %v1964, 7
        %v1966 = vsub.s32 %v1963, %v1965
        %v1967 = vrot.slane %v1960, %v1966
        %v1969 = vadd.f32 %v661, %v1967
        %1970 = vst [vmem:[#allocation2] sm:$0xf] %v1969
        // Predicated region
        $region37: #{tpu_custom_call.1} parent=31 // pred_check
          %p1971 = pneg %p123
        $region38: #{tpu_custom_call.1} parent=31 // pred_check_branch
          %1973 = sbr.rel (%p1971) target = $region40
        $region39: #{tpu_custom_call.1} parent=31 // pred_region
          %s1974 = smul.u32 2, %s19
          %s1976 = ssub.s32 64, 64
          %1977 = vsyncadd [#allocation3], %s1976
          %s1978 = smul.addr %s1974, 32
          %s1979 = scalar_lea.hbm %s3, %s1978
          %s1981 = sshll.u32 [#allocation2], 4
          %s1982 = int_to_ptr.vmem [resolvable:$true] %s1981
          %1984 = dma.vmem_to_hbm [thread:$0]  %s1982, 64, %s1979, [#allocation3]
        $region40: #{tpu_custom_call.1} parent=31 // pred_fallthru
          _
        // Predicated region
        $region41: #{tpu_custom_call.1} parent=31 // pred_check
          %p1985 = pneg %p123
        $region42: #{tpu_custom_call.1} parent=31 // pred_check_branch
          %1987 = sbr.rel (%p1985) target = $region44
        $region43: #{tpu_custom_call.1} parent=31 // pred_region
          %1988 = dma.done [#allocation3], 64
        $region44: #{tpu_custom_call.1} parent=31 // pred_fallthru
          _
      $region32: #{tpu_custom_call.1} parent=5 // pred_fallthru
        _
      %p1989 = scmp.le.s32.totalorder 2, %s10
      // Predicated region
      $region45: #{tpu_custom_call.1} parent=5 // pred_check
        %p1990 = pneg %p1989
      $region46: #{tpu_custom_call.1} parent=5 // pred_check_branch
        %1992 = sbr.rel (%p1990) target = $region48
      $region47: #{tpu_custom_call.1} parent=5 // pred_region
        %s1993 = ssub.s32 %s10, 2
      $region48: #{tpu_custom_call.1} parent=5 // pred_fallthru
        _
    $region6: #{tpu_custom_call.1} parent=1 // loop_footer
      %s14 = sadd.s32 1, %s10
    $region7: #{tpu_custom_call.1} parent=1 // loop_footer_branch
      %9 = sbr.rel target = $region3
    $region8: #{tpu_custom_call.1} parent=1 // loop_exit
      _
    %1994 = vsyncpa [#allocation3], 1
    %s1995 = scalar_lea.sflag [#allocation3], 1
    %1996 = vsyncpa %s1995, 1

</llo_original>
